<compile_context>
chip_gen: v7x
topology: tpu7x:2x2x1
jax: 0.10.0
libtpu: 0.0.40
codegen_flags: <defaults>
</compile_context>

<pallas_src>
import math
import functools
import numpy as np
import jax
import jax.numpy as jnp
from jax import lax
from jax.experimental import pallas as pl
from jax.experimental.pallas import tpu as pltpu

K_MOTIF, P_MOTIF = 51, 25
K_OTHER, P_OTHER = 3, 1
KP_PATCH = 4 * K_MOTIF + 4      # 204 tap rows + [1,0,0,0] bias/pad rows = 208 (16-aligned)
BN_EPS = 1e-5


# ----------------------------- Pallas kernel --------------------------------
def _encoder_kernel(x_ref, wconv_ref, ecat_ref, w1_ref, cols_ref, out_ref, patch_ref,
                    *, n_motif_ch):
    F = wconv_ref.shape[0]
    L = out_ref.shape[2]

    # ---- in-kernel im2col (channel-major): patch[4k+c, l] = xpad[c, l+k] ----
    for k in range(K_MOTIF):                              # 51 static shifted copies
        patch_ref[4 * k:4 * (k + 1), :] = x_ref[0, :, k:k + L]
    # Pad rows 204..207: row 204 == 1.0 carries the conv bias (folded into the
    # matching wconv column); rows 205..207 are zeroed (scratch persists).
    sub = lax.broadcasted_iota(jnp.int32, (4, L), 0)
    patch_ref[4 * K_MOTIF:, :] = jnp.where(sub == 0, 1.0, 0.0).astype(patch_ref.dtype)

    # ---- fused motif+other conv, both strands, bias included: one bf16 MXU dot
    pre = jnp.dot(wconv_ref[...], patch_ref[...],
                  preferred_element_type=jnp.float32)              # (F, L) f32
    acts = jax.nn.sigmoid(pre)                                     # (F, L) f32

    # ---- ECA channel attention on the VPU/XLU (banded matrix, no MXU load) --
    #   att_pre[i] = sum_j ecat[j, i] * mean_L(acts[j]); motif channels gated,
    #   "other" channels pass through (gate = 1).
    chan_mean = jnp.mean(acts, axis=1, keepdims=True)                        # (F, 1)
    att_pre = jnp.sum(ecat_ref[...] * chan_mean, axis=0, keepdims=True)      # (1, F)
    lane = lax.broadcasted_iota(jnp.int32, (1, F), 1)
    gate = jnp.where(lane < n_motif_ch, jax.nn.sigmoid(att_pre), 1.0)        # (1, F)

    # ---- 1x1 conv: ECA gate (columns) and BN scale sc_c (rows, pre-folded in
    #      init) live inside the bf16 weight, so h = conv1 + sh_c.
    w1g = (w1_ref[...] * gate).astype(jnp.bfloat16)                          # (F, F)
    conv1 = jnp.dot(w1g, acts.astype(jnp.bfloat16),
                    preferred_element_type=jnp.float32)                      # (F, L)

    # ---- BN shift + SiLU, identity avg/max "pools" + BN + SiLU --------------
    # bf16 EUP sigmoids (f32 multiplies), single running accumulator.
    cols = cols_ref[...]
    h = conv1 + cols[:, 0:1]                                       # + sh_c
    feature = h * jax.nn.sigmoid(h.astype(jnp.bfloat16))
    ha = feature * cols[:, 1:2] + cols[:, 2:3]
    hm = feature * cols[:, 3:4] + cols[:, 4:5]
    out = ha * jax.nn.sigmoid(ha.astype(jnp.bfloat16))
    out = out + hm * jax.nn.sigmoid(hm.astype(jnp.bfloat16))
    out = out + feature
    out_ref[0] = out.astype(out_ref.dtype)                         # lane-dense NCL store


# ------------------------------- wrapper -------------------------------------
def encoder_forward(x_ncl, kp, pool_target=None):
    """x_ncl: (B, 4, L) float32, PyTorch NCL layout. Returns (B, feature_dim, L)."""
    B, Cin, L = x_ncl.shape
    assert Cin == 4
    # Adaptive avg/max pools are treated as identity -> only valid if L equals
    # the pool target (4650 in the real model).
    assert pool_target is None or pool_target == L, \
        "adaptive pools are identity only when L == pool target"
    F = kp["w1s"].shape[0]
    KP = kp["wconv"].shape[1]
    Lp = L + 2 * P_MOTIF

    # Only the raw padded input ships to the kernel (bf16, ~37 KB/batch @ L=4650);
    # im2col happens inside VMEM.
    xpad = jnp.pad(x_ncl, ((0, 0), (0, 0), (P_MOTIF, P_MOTIF))).astype(jnp.bfloat16)

    kernel = functools.partial(_encoder_kernel, n_motif_ch=int(kp["n_motif_ch"]))
    out = pl.pallas_call(
        kernel,
        # TODO(synk): emit bf16 here if the downstream consumer tolerates it
        #             (halves the dominant HBM writeback stream).
        out_shape=jax.ShapeDtypeStruct((B, F, L), jnp.float32),
        grid_spec=pltpu.PrefetchScalarGridSpec(
            num_scalar_prefetch=0,
            grid=(B,),
            in_specs=[
                pl.BlockSpec((1, 4, Lp), lambda b: (b, 0, 0)),   # raw padded input (bf16)
                pl.BlockSpec((F, KP), lambda b: (0, 0)),         # fused conv weight + bias col
                pl.BlockSpec((F, F), lambda b: (0, 0)),          # ECA band (f32)
                pl.BlockSpec((F, F), lambda b: (0, 0)),          # 1x1 weight * sc_c (f32)
                pl.BlockSpec((F, 8), lambda b: (0, 0)),          # BN shifts/scales
            ],
            out_specs=pl.BlockSpec((1, F, L), lambda b: (b, 0, 0)),
            scratch_shapes=[pltpu.VMEM((KP, L), jnp.bfloat16)],  # im2col patch scratch
        ),
        compiler_params=pltpu.CompilerParams(
            dimension_semantics=("parallel",),                   # batch iters independent
            vmem_limit_bytes=48 * 1024 * 1024,                   # explicit budget (<= v7x 64 MiB)
        ),
    )(xpad, kp["wconv"], kp["ecat"], kp["w1s"], kp["cols"])
    return out


# ------------------------ deterministic parameter init -----------------------
def init_params(n_motifs, n_others, key):
    Cm, Co = 2 * n_motifs, 2 * n_others
    F = Cm + Co
    ks = jax.random.split(key, 12)

    def bf16_round(a):
        # Weights/biases stored at bf16 precision so the f32 reference and the
        # bf16 MXU path consume bit-identical operands.
        return np.asarray(jnp.asarray(a).astype(jnp.bfloat16).astype(jnp.float32))

    w_motif = bf16_round(0.1 * jax.random.normal(ks[0], (n_motifs, 4, K_MOTIF), jnp.float32))
    b_motif = bf16_round(0.1 * jax.random.normal(ks[1], (n_motifs,), jnp.float32))
    w_other = bf16_round(0.1 * jax.random.normal(ks[2], (n_others, 4, K_OTHER), jnp.float32))
    b_other = bf16_round(0.1 * jax.random.normal(ks[3], (n_others,), jnp.float32))

    # ECA kernel size (standard formula, b=1, gamma=2), forced odd
    t = int(abs((math.log2(Cm) + 1) / 2))
    ke = t if t % 2 else t + 1
    w_eca = np.asarray(jax.random.normal(ks[4], (ke,), jnp.float32))

    w1 = bf16_round((1.0 / math.sqrt(F)) * jax.random.normal(ks[5], (F, F), jnp.float32))

    def bn_fold(k):
        k1, k2, k3, k4 = jax.random.split(k, 4)
        gamma = 1.0 + 0.1 * jax.random.normal(k1, (F,), jnp.float32)
        beta = 0.1 * jax.random.normal(k2, (F,), jnp.float32)
        mean = 0.1 * jax.random.normal(k3, (F,), jnp.float32)
        var = jnp.abs(1.0 + 0.1 * jax.random.normal(k4, (F,), jnp.float32))
        scale = gamma / jnp.sqrt(var + BN_EPS)
        shift = beta - mean * scale
        return np.asarray(scale), np.asarray(shift)

    sc_c, sh_c = bn_fold(ks[6])
    sc_a, sh_a = bn_fold(ks[7])
    sc_m, sh_m = bn_fold(ks[8])

    raw = dict(w_motif=jnp.asarray(w_motif), b_motif=jnp.asarray(b_motif),
               w_other=jnp.asarray(w_other), b_other=jnp.asarray(b_other),
               w_eca=jnp.asarray(w_eca), ke=ke, w1=jnp.asarray(w1),
               sc_c=jnp.asarray(sc_c), sh_c=jnp.asarray(sh_c),
               sc_a=jnp.asarray(sc_a), sh_a=jnp.asarray(sh_a),
               sc_m=jnp.asarray(sc_m), sh_m=jnp.asarray(sh_m))

    # ---- pack into kernel-ready, channel-major form ----
    # RC strand == conv with channel- and kernel-flipped weights.
    wm_both = np.concatenate([w_motif, w_motif[:, ::-1, ::-1]], axis=0)   # (Cm, 4, 51)
    wo_both = np.concatenate([w_other, w_other[:, ::-1, ::-1]], axis=0)   # (Co, 4, 3)
    bias = np.concatenate([b_motif, b_motif, b_other, b_other]).astype(np.float32)

    wconv = np.zeros((F, KP_PATCH), np.float32)
    # motif rows: column 4*k + c  <->  patch[4*k + c, l] = xpad[c, l + k]
    wconv[:Cm, :4 * K_MOTIF] = wm_both.transpose(0, 2, 1).reshape(Cm, 4 * K_MOTIF)
    # other rows: conv_other (padding=1) uses taps 24..26 of the 51-tap window
    off = 4 * (P_MOTIF - P_OTHER)
    wconv[Cm:, off:off + 4 * K_OTHER] = wo_both.transpose(0, 2, 1).reshape(Co, 4 * K_OTHER)
    # bias lives in the column matched by the constant-1.0 patch row
    wconv[:, 4 * K_MOTIF] = bias

    # ECA band: ecat[j, i] = w_eca[k] where j = i + k - ke//2 (zero outside motif block)
    ecat = np.zeros((F, F), np.float32)
    pad = ke // 2
    for i in range(Cm):
        for k in range(ke):
            j = i + k - pad
            if 0 <= j < Cm:
                ecat[j, i] = w_eca[k]

    # First BN scale folded into the 1x1 weight rows (ECA gate folded in-kernel).
    w1s = w1 * sc_c[:, None]

    cols = np.stack([sh_c, sc_a, sh_a, sc_m, sh_m,
                     np.zeros(F, np.float32), np.zeros(F, np.float32),
                     np.zeros(F, np.float32)], axis=1)                    # (F, 8)

    kernel_params = dict(
        wconv=jnp.asarray(wconv, jnp.bfloat16),   # exact cast (built from bf16-rounded vals)
        ecat=jnp.asarray(ecat, jnp.float32),
        w1s=jnp.asarray(w1s, jnp.float32),        # gated + bf16-cast in-kernel
        cols=jnp.asarray(cols, jnp.float32),
        n_motif_ch=Cm)
    return raw, kernel_params


# ---------------------- pure-JAX reference (PyTorch semantics) ----------------
def reference_forward(x, p):
    def conv1d(x, w, b, pad):
        y = lax.conv_general_dilated(x, w, window_strides=(1,), padding=[(pad, pad)],
                                     dimension_numbers=("NCH", "OIH", "NCH"))
        return y + b[None, :, None]

    x_rc = x[:, ::-1, ::-1]
    y_motif = jnp.concatenate(
        [conv1d(x, p["w_motif"], p["b_motif"], P_MOTIF),
         conv1d(x_rc, p["w_motif"], p["b_motif"], P_MOTIF)[:, :, ::-1]], axis=1)
    y_other = jnp.concatenate(
        [conv1d(x, p["w_other"], p["b_other"], P_OTHER),
         conv1d(x_rc, p["w_other"], p["b_other"], P_OTHER)[:, :, ::-1]], axis=1)

    motif_act = jax.nn.sigmoid(y_motif)
    # ECA
    cm = jnp.mean(motif_act, axis=2)[:, None, :]                       # (B, 1, Cm)
    ke = p["ke"]
    att = lax.conv_general_dilated(cm, p["w_eca"][None, None, :], (1,),
                                   [(ke // 2, ke // 2)],
                                   dimension_numbers=("NCH", "OIH", "NCH"))
    att = jax.nn.sigmoid(att)                                          # (B, 1, Cm)
    motif_act = motif_act * att[:, 0, :, None]

    other_act = jax.nn.sigmoid(y_other)
    feat_in = jnp.concatenate([motif_act, other_act], axis=1)          # (B, F, L)
    conv1 = jnp.einsum("oi,bil->bol", p["w1"], feat_in)

    def bn_silu(h, scale, shift):
        h = h * scale[None, :, None] + shift[None, :, None]
        return h * jax.nn.sigmoid(h)

    feature = bn_silu(conv1, p["sc_c"], p["sh_c"])
    # Adaptive pools with target == L are identity
    oup = bn_silu(feature, p["sc_a"], p["sh_a"]) + bn_silu(feature, p["sc_m"], p["sh_m"])
    return oup + feature


# ----------------------------------- main -------------------------------------
if __name__ == "__main__":
    n_motifs, n_others = 6, 4          # feature_dim = 20
    B, L = 2, 64                       # L plays the role of 4650 (== pool target)

    key = jax.random.PRNGKey(0)
    k_x, k_p = jax.random.split(key)
    raw, kp = init_params(n_motifs, n_others, k_p)

    # One-hot DNA input (as in the real model), PyTorch NCL layout (B, 4, L).
    bases = jax.random.randint(k_x, (B, L), 0, 4)
    x = jnp.transpose(jax.nn.one_hot(bases, 4, dtype=jnp.float32), (0, 2, 1))

    out = jax.jit(lambda xx: encoder_forward(xx, kp))(x)
    out = jax.block_until_ready(out)

    ref = jax.block_until_ready(reference_forward(x, raw))
    # Tolerance covers: bf16 MXU operands (f32 accumulation, weights shared
    # bit-exact with the reference), bf16 EUP sigmoids in the SiLU epilogue,
    # and the gate/sc_c being folded into w1 before its bf16 cast.
    np.testing.assert_allclose(np.asarray(out), np.asarray(ref), rtol=2e-2, atol=2e-2)

    print("KERNEL_OK")
</pallas_src>

<mosaic_0001>
module attributes {stable_mosaic.version = 11 : i64} {
  func.func @_encoder_kernel(%arg0: i32, %arg1: memref<1x4x114xbf16, #tpu.memory_space<vmem>>, %arg2: memref<20x208xbf16, #tpu.memory_space<vmem>>, %arg3: memref<20x20xf32, #tpu.memory_space<vmem>>, %arg4: memref<20x20xf32, #tpu.memory_space<vmem>>, %arg5: memref<20x8xf32, #tpu.memory_space<vmem>>, %arg6: memref<1x20x64xf32, #tpu.memory_space<vmem>>, %arg7: memref<208x64xbf16, #tpu.memory_space<vmem>>) attributes {dimension_semantics = [#tpu.dimension_semantics<parallel>], iteration_bounds = array<i64: 2>, scalar_prefetch = 0 : i64, scratch_operands = 1 : i64, tpu.core_type = #tpu.core_type<tc>, window_params = [{transform_indices = @transform_0, window_bounds = array<i64: 1, 4, 114>}, {pipeline_mode = #tpu.pipeline_mode<synchronous>, transform_indices = @transform_1, window_bounds = array<i64: 20, 208>}, {pipeline_mode = #tpu.pipeline_mode<synchronous>, transform_indices = @transform_2, window_bounds = array<i64: 20, 20>}, {pipeline_mode = #tpu.pipeline_mode<synchronous>, transform_indices = @transform_3, window_bounds = array<i64: 20, 20>}, {pipeline_mode = #tpu.pipeline_mode<synchronous>, transform_indices = @transform_4, window_bounds = array<i64: 20, 8>}, {transform_indices = @transform_5, window_bounds = array<i64: 1, 20, 64>}]} {
    %c0 = arith.constant 0 : index
    %c0_0 = arith.constant 0 : index
    %c0_1 = arith.constant 0 : index
    %0 = vector.load %arg1[%c0, %c0_0, %c0_1] : memref<1x4x114xbf16, #tpu.memory_space<vmem>>, vector<1x4x64xbf16>
    %1 = vector.shape_cast %0 : vector<1x4x64xbf16> to vector<4x64xbf16>
    %c0_2 = arith.constant 0 : index
    %c0_3 = arith.constant 0 : index
    %2 = vector.load %arg7[%c0_2, %c0_3] : memref<208x64xbf16, #tpu.memory_space<vmem>>, vector<4x64xbf16>
    tpu.vector_store %arg7[%c0_2, %c0_3], %1 {strides = array<i32>} : memref<208x64xbf16, #tpu.memory_space<vmem>>, vector<4x64xbf16>,
    %c0_4 = arith.constant 0 : index
    %c0_5 = arith.constant 0 : index
    %c1 = arith.constant 1 : index
    %3 = vector.load %arg1[%c0_4, %c0_5, %c1] : memref<1x4x114xbf16, #tpu.memory_space<vmem>>, vector<1x4x64xbf16>
    %4 = vector.shape_cast %3 : vector<1x4x64xbf16> to vector<4x64xbf16>
    %c4 = arith.constant 4 : index
    %c0_6 = arith.constant 0 : index
    %5 = vector.load %arg7[%c4, %c0_6] : memref<208x64xbf16, #tpu.memory_space<vmem>>, vector<4x64xbf16>
    tpu.vector_store %arg7[%c4, %c0_6], %4 {strides = array<i32>} : memref<208x64xbf16, #tpu.memory_space<vmem>>, vector<4x64xbf16>,
    %c0_7 = arith.constant 0 : index
    %c0_8 = arith.constant 0 : index
    %c2 = arith.constant 2 : index
    %6 = vector.load %arg1[%c0_7, %c0_8, %c2] : memref<1x4x114xbf16, #tpu.memory_space<vmem>>, vector<1x4x64xbf16>
    %7 = vector.shape_cast %6 : vector<1x4x64xbf16> to vector<4x64xbf16>
    %c8 = arith.constant 8 : index
    %c0_9 = arith.constant 0 : index
    %8 = vector.load %arg7[%c8, %c0_9] : memref<208x64xbf16, #tpu.memory_space<vmem>>, vector<4x64xbf16>
    tpu.vector_store %arg7[%c8, %c0_9], %7 {strides = array<i32>} : memref<208x64xbf16, #tpu.memory_space<vmem>>, vector<4x64xbf16>,
    %c0_10 = arith.constant 0 : index
    %c0_11 = arith.constant 0 : index
    %c3 = arith.constant 3 : index
    %9 = vector.load %arg1[%c0_10, %c0_11, %c3] : memref<1x4x114xbf16, #tpu.memory_space<vmem>>, vector<1x4x64xbf16>
    %10 = vector.shape_cast %9 : vector<1x4x64xbf16> to vector<4x64xbf16>
    %c12 = arith.constant 12 : index
    %c0_12 = arith.constant 0 : index
    %11 = vector.load %arg7[%c12, %c0_12] : memref<208x64xbf16, #tpu.memory_space<vmem>>, vector<4x64xbf16>
    tpu.vector_store %arg7[%c12, %c0_12], %10 {strides = array<i32>} : memref<208x64xbf16, #tpu.memory_space<vmem>>, vector<4x64xbf16>,
    %c0_13 = arith.constant 0 : index
    %c0_14 = arith.constant 0 : index
    %c4_15 = arith.constant 4 : index
    %12 = vector.load %arg1[%c0_13, %c0_14, %c4_15] : memref<1x4x114xbf16, #tpu.memory_space<vmem>>, vector<1x4x64xbf16>
    %13 = vector.shape_cast %12 : vector<1x4x64xbf16> to vector<4x64xbf16>
    %c16 = arith.constant 16 : index
    %c0_16 = arith.constant 0 : index
    %14 = vector.load %arg7[%c16, %c0_16] : memref<208x64xbf16, #tpu.memory_space<vmem>>, vector<4x64xbf16>
    tpu.vector_store %arg7[%c16, %c0_16], %13 {strides = array<i32>} : memref<208x64xbf16, #tpu.memory_space<vmem>>, vector<4x64xbf16>,
    %c0_17 = arith.constant 0 : index
    %c0_18 = arith.constant 0 : index
    %c5 = arith.constant 5 : index
    %15 = vector.load %arg1[%c0_17, %c0_18, %c5] : memref<1x4x114xbf16, #tpu.memory_space<vmem>>, vector<1x4x64xbf16>
    %16 = vector.shape_cast %15 : vector<1x4x64xbf16> to vector<4x64xbf16>
    %c20 = arith.constant 20 : index
    %c0_19 = arith.constant 0 : index
    %17 = vector.load %arg7[%c20, %c0_19] : memref<208x64xbf16, #tpu.memory_space<vmem>>, vector<4x64xbf16>
    tpu.vector_store %arg7[%c20, %c0_19], %16 {strides = array<i32>} : memref<208x64xbf16, #tpu.memory_space<vmem>>, vector<4x64xbf16>,
    %c0_20 = arith.constant 0 : index
    %c0_21 = arith.constant 0 : index
    %c6 = arith.constant 6 : index
    %18 = vector.load %arg1[%c0_20, %c0_21, %c6] : memref<1x4x114xbf16, #tpu.memory_space<vmem>>, vector<1x4x64xbf16>
    %19 = vector.shape_cast %18 : vector<1x4x64xbf16> to vector<4x64xbf16>
    %c24 = arith.constant 24 : index
    %c0_22 = arith.constant 0 : index
    %20 = vector.load %arg7[%c24, %c0_22] : memref<208x64xbf16, #tpu.memory_space<vmem>>, vector<4x64xbf16>
    tpu.vector_store %arg7[%c24, %c0_22], %19 {strides = array<i32>} : memref<208x64xbf16, #tpu.memory_space<vmem>>, vector<4x64xbf16>,
    %c0_23 = arith.constant 0 : index
    %c0_24 = arith.constant 0 : index
    %c7 = arith.constant 7 : index
    %21 = vector.load %arg1[%c0_23, %c0_24, %c7] : memref<1x4x114xbf16, #tpu.memory_space<vmem>>, vector<1x4x64xbf16>
    %22 = vector.shape_cast %21 : vector<1x4x64xbf16> to vector<4x64xbf16>
    %c28 = arith.constant 28 : index
    %c0_25 = arith.constant 0 : index
    %23 = vector.load %arg7[%c28, %c0_25] : memref<208x64xbf16, #tpu.memory_space<vmem>>, vector<4x64xbf16>
    tpu.vector_store %arg7[%c28, %c0_25], %22 {strides = array<i32>} : memref<208x64xbf16, #tpu.memory_space<vmem>>, vector<4x64xbf16>,
    %c0_26 = arith.constant 0 : index
    %c0_27 = arith.constant 0 : index
    %c8_28 = arith.constant 8 : index
    %24 = vector.load %arg1[%c0_26, %c0_27, %c8_28] : memref<1x4x114xbf16, #tpu.memory_space<vmem>>, vector<1x4x64xbf16>
    %25 = vector.shape_cast %24 : vector<1x4x64xbf16> to vector<4x64xbf16>
    %c32 = arith.constant 32 : index
    %c0_29 = arith.constant 0 : index
    %26 = vector.load %arg7[%c32, %c0_29] : memref<208x64xbf16, #tpu.memory_space<vmem>>, vector<4x64xbf16>
    tpu.vector_store %arg7[%c32, %c0_29], %25 {strides = array<i32>} : memref<208x64xbf16, #tpu.memory_space<vmem>>, vector<4x64xbf16>,
    %c0_30 = arith.constant 0 : index
    %c0_31 = arith.constant 0 : index
    %c9 = arith.constant 9 : index
    %27 = vector.load %arg1[%c0_30, %c0_31, %c9] : memref<1x4x114xbf16, #tpu.memory_space<vmem>>, vector<1x4x64xbf16>
    %28 = vector.shape_cast %27 : vector<1x4x64xbf16> to vector<4x64xbf16>
    %c36 = arith.constant 36 : index
    %c0_32 = arith.constant 0 : index
    %29 = vector.load %arg7[%c36, %c0_32] : memref<208x64xbf16, #tpu.memory_space<vmem>>, vector<4x64xbf16>
    tpu.vector_store %arg7[%c36, %c0_32], %28 {strides = array<i32>} : memref<208x64xbf16, #tpu.memory_space<vmem>>, vector<4x64xbf16>,
    %c0_33 = arith.constant 0 : index
    %c0_34 = arith.constant 0 : index
    %c10 = arith.constant 10 : index
    %30 = vector.load %arg1[%c0_33, %c0_34, %c10] : memref<1x4x114xbf16, #tpu.memory_space<vmem>>, vector<1x4x64xbf16>
    %31 = vector.shape_cast %30 : vector<1x4x64xbf16> to vector<4x64xbf16>
    %c40 = arith.constant 40 : index
    %c0_35 = arith.constant 0 : index
    %32 = vector.load %arg7[%c40, %c0_35] : memref<208x64xbf16, #tpu.memory_space<vmem>>, vector<4x64xbf16>
    tpu.vector_store %arg7[%c40, %c0_35], %31 {strides = array<i32>} : memref<208x64xbf16, #tpu.memory_space<vmem>>, vector<4x64xbf16>,
    %c0_36 = arith.constant 0 : index
    %c0_37 = arith.constant 0 : index
    %c11 = arith.constant 11 : index
    %33 = vector.load %arg1[%c0_36, %c0_37, %c11] : memref<1x4x114xbf16, #tpu.memory_space<vmem>>, vector<1x4x64xbf16>
    %34 = vector.shape_cast %33 : vector<1x4x64xbf16> to vector<4x64xbf16>
    %c44 = arith.constant 44 : index
    %c0_38 = arith.constant 0 : index
    %35 = vector.load %arg7[%c44, %c0_38] : memref<208x64xbf16, #tpu.memory_space<vmem>>, vector<4x64xbf16>
    tpu.vector_store %arg7[%c44, %c0_38], %34 {strides = array<i32>} : memref<208x64xbf16, #tpu.memory_space<vmem>>, vector<4x64xbf16>,
    %c0_39 = arith.constant 0 : index
    %c0_40 = arith.constant 0 : index
    %c12_41 = arith.constant 12 : index
    %36 = vector.load %arg1[%c0_39, %c0_40, %c12_41] : memref<1x4x114xbf16, #tpu.memory_space<vmem>>, vector<1x4x64xbf16>
    %37 = vector.shape_cast %36 : vector<1x4x64xbf16> to vector<4x64xbf16>
    %c48 = arith.constant 48 : index
    %c0_42 = arith.constant 0 : index
    %38 = vector.load %arg7[%c48, %c0_42] : memref<208x64xbf16, #tpu.memory_space<vmem>>, vector<4x64xbf16>
    tpu.vector_store %arg7[%c48, %c0_42], %37 {strides = array<i32>} : memref<208x64xbf16, #tpu.memory_space<vmem>>, vector<4x64xbf16>,
    %c0_43 = arith.constant 0 : index
    %c0_44 = arith.constant 0 : index
    %c13 = arith.constant 13 : index
    %39 = vector.load %arg1[%c0_43, %c0_44, %c13] : memref<1x4x114xbf16, #tpu.memory_space<vmem>>, vector<1x4x64xbf16>
    %40 = vector.shape_cast %39 : vector<1x4x64xbf16> to vector<4x64xbf16>
    %c52 = arith.constant 52 : index
    %c0_45 = arith.constant 0 : index
    %41 = vector.load %arg7[%c52, %c0_45] : memref<208x64xbf16, #tpu.memory_space<vmem>>, vector<4x64xbf16>
    tpu.vector_store %arg7[%c52, %c0_45], %40 {strides = array<i32>} : memref<208x64xbf16, #tpu.memory_space<vmem>>, vector<4x64xbf16>,
    %c0_46 = arith.constant 0 : index
    %c0_47 = arith.constant 0 : index
    %c14 = arith.constant 14 : index
    %42 = vector.load %arg1[%c0_46, %c0_47, %c14] : memref<1x4x114xbf16, #tpu.memory_space<vmem>>, vector<1x4x64xbf16>
    %43 = vector.shape_cast %42 : vector<1x4x64xbf16> to vector<4x64xbf16>
    %c56 = arith.constant 56 : index
    %c0_48 = arith.constant 0 : index
    %44 = vector.load %arg7[%c56, %c0_48] : memref<208x64xbf16, #tpu.memory_space<vmem>>, vector<4x64xbf16>
    tpu.vector_store %arg7[%c56, %c0_48], %43 {strides = array<i32>} : memref<208x64xbf16, #tpu.memory_space<vmem>>, vector<4x64xbf16>,
    %c0_49 = arith.constant 0 : index
    %c0_50 = arith.constant 0 : index
    %c15 = arith.constant 15 : index
    %45 = vector.load %arg1[%c0_49, %c0_50, %c15] : memref<1x4x114xbf16, #tpu.memory_space<vmem>>, vector<1x4x64xbf16>
    %46 = vector.shape_cast %45 : vector<1x4x64xbf16> to vector<4x64xbf16>
    %c60 = arith.constant 60 : index
    %c0_51 = arith.constant 0 : index
    %47 = vector.load %arg7[%c60, %c0_51] : memref<208x64xbf16, #tpu.memory_space<vmem>>, vector<4x64xbf16>
    tpu.vector_store %arg7[%c60, %c0_51], %46 {strides = array<i32>} : memref<208x64xbf16, #tpu.memory_space<vmem>>, vector<4x64xbf16>,
    %c0_52 = arith.constant 0 : index
    %c0_53 = arith.constant 0 : index
    %c16_54 = arith.constant 16 : index
    %48 = vector.load %arg1[%c0_52, %c0_53, %c16_54] : memref<1x4x114xbf16, #tpu.memory_space<vmem>>, vector<1x4x64xbf16>
    %49 = vector.shape_cast %48 : vector<1x4x64xbf16> to vector<4x64xbf16>
    %c64 = arith.constant 64 : index
    %c0_55 = arith.constant 0 : index
    %50 = vector.load %arg7[%c64, %c0_55] : memref<208x64xbf16, #tpu.memory_space<vmem>>, vector<4x64xbf16>
    tpu.vector_store %arg7[%c64, %c0_55], %49 {strides = array<i32>} : memref<208x64xbf16, #tpu.memory_space<vmem>>, vector<4x64xbf16>,
    %c0_56 = arith.constant 0 : index
    %c0_57 = arith.constant 0 : index
    %c17 = arith.constant 17 : index
    %51 = vector.load %arg1[%c0_56, %c0_57, %c17] : memref<1x4x114xbf16, #tpu.memory_space<vmem>>, vector<1x4x64xbf16>
    %52 = vector.shape_cast %51 : vector<1x4x64xbf16> to vector<4x64xbf16>
    %c68 = arith.constant 68 : index
    %c0_58 = arith.constant 0 : index
    %53 = vector.load %arg7[%c68, %c0_58] : memref<208x64xbf16, #tpu.memory_space<vmem>>, vector<4x64xbf16>
    tpu.vector_store %arg7[%c68, %c0_58], %52 {strides = array<i32>} : memref<208x64xbf16, #tpu.memory_space<vmem>>, vector<4x64xbf16>,
    %c0_59 = arith.constant 0 : index
    %c0_60 = arith.constant 0 : index
    %c18 = arith.constant 18 : index
    %54 = vector.load %arg1[%c0_59, %c0_60, %c18] : memref<1x4x114xbf16, #tpu.memory_space<vmem>>, vector<1x4x64xbf16>
    %55 = vector.shape_cast %54 : vector<1x4x64xbf16> to vector<4x64xbf16>
    %c72 = arith.constant 72 : index
    %c0_61 = arith.constant 0 : index
    %56 = vector.load %arg7[%c72, %c0_61] : memref<208x64xbf16, #tpu.memory_space<vmem>>, vector<4x64xbf16>
    tpu.vector_store %arg7[%c72, %c0_61], %55 {strides = array<i32>} : memref<208x64xbf16, #tpu.memory_space<vmem>>, vector<4x64xbf16>,
    %c0_62 = arith.constant 0 : index
    %c0_63 = arith.constant 0 : index
    %c19 = arith.constant 19 : index
    %57 = vector.load %arg1[%c0_62, %c0_63, %c19] : memref<1x4x114xbf16, #tpu.memory_space<vmem>>, vector<1x4x64xbf16>
    %58 = vector.shape_cast %57 : vector<1x4x64xbf16> to vector<4x64xbf16>
    %c76 = arith.constant 76 : index
    %c0_64 = arith.constant 0 : index
    %59 = vector.load %arg7[%c76, %c0_64] : memref<208x64xbf16, #tpu.memory_space<vmem>>, vector<4x64xbf16>
    tpu.vector_store %arg7[%c76, %c0_64], %58 {strides = array<i32>} : memref<208x64xbf16, #tpu.memory_space<vmem>>, vector<4x64xbf16>,
    %c0_65 = arith.constant 0 : index
    %c0_66 = arith.constant 0 : index
    %c20_67 = arith.constant 20 : index
    %60 = vector.load %arg1[%c0_65, %c0_66, %c20_67] : memref<1x4x114xbf16, #tpu.memory_space<vmem>>, vector<1x4x64xbf16>
    %61 = vector.shape_cast %60 : vector<1x4x64xbf16> to vector<4x64xbf16>
    %c80 = arith.constant 80 : index
    %c0_68 = arith.constant 0 : index
    %62 = vector.load %arg7[%c80, %c0_68] : memref<208x64xbf16, #tpu.memory_space<vmem>>, vector<4x64xbf16>
    tpu.vector_store %arg7[%c80, %c0_68], %61 {strides = array<i32>} : memref<208x64xbf16, #tpu.memory_space<vmem>>, vector<4x64xbf16>,
    %c0_69 = arith.constant 0 : index
    %c0_70 = arith.constant 0 : index
    %c21 = arith.constant 21 : index
    %63 = vector.load %arg1[%c0_69, %c0_70, %c21] : memref<1x4x114xbf16, #tpu.memory_space<vmem>>, vector<1x4x64xbf16>
    %64 = vector.shape_cast %63 : vector<1x4x64xbf16> to vector<4x64xbf16>
    %c84 = arith.constant 84 : index
    %c0_71 = arith.constant 0 : index
    %65 = vector.load %arg7[%c84, %c0_71] : memref<208x64xbf16, #tpu.memory_space<vmem>>, vector<4x64xbf16>
    tpu.vector_store %arg7[%c84, %c0_71], %64 {strides = array<i32>} : memref<208x64xbf16, #tpu.memory_space<vmem>>, vector<4x64xbf16>,
    %c0_72 = arith.constant 0 : index
    %c0_73 = arith.constant 0 : index
    %c22 = arith.constant 22 : index
    %66 = vector.load %arg1[%c0_72, %c0_73, %c22] : memref<1x4x114xbf16, #tpu.memory_space<vmem>>, vector<1x4x64xbf16>
    %67 = vector.shape_cast %66 : vector<1x4x64xbf16> to vector<4x64xbf16>
    %c88 = arith.constant 88 : index
    %c0_74 = arith.constant 0 : index
    %68 = vector.load %arg7[%c88, %c0_74] : memref<208x64xbf16, #tpu.memory_space<vmem>>, vector<4x64xbf16>
    tpu.vector_store %arg7[%c88, %c0_74], %67 {strides = array<i32>} : memref<208x64xbf16, #tpu.memory_space<vmem>>, vector<4x64xbf16>,
    %c0_75 = arith.constant 0 : index
    %c0_76 = arith.constant 0 : index
    %c23 = arith.constant 23 : index
    %69 = vector.load %arg1[%c0_75, %c0_76, %c23] : memref<1x4x114xbf16, #tpu.memory_space<vmem>>, vector<1x4x64xbf16>
    %70 = vector.shape_cast %69 : vector<1x4x64xbf16> to vector<4x64xbf16>
    %c92 = arith.constant 92 : index
    %c0_77 = arith.constant 0 : index
    %71 = vector.load %arg7[%c92, %c0_77] : memref<208x64xbf16, #tpu.memory_space<vmem>>, vector<4x64xbf16>
    tpu.vector_store %arg7[%c92, %c0_77], %70 {strides = array<i32>} : memref<208x64xbf16, #tpu.memory_space<vmem>>, vector<4x64xbf16>,
    %c0_78 = arith.constant 0 : index
    %c0_79 = arith.constant 0 : index
    %c24_80 = arith.constant 24 : index
    %72 = vector.load %arg1[%c0_78, %c0_79, %c24_80] : memref<1x4x114xbf16, #tpu.memory_space<vmem>>, vector<1x4x64xbf16>
    %73 = vector.shape_cast %72 : vector<1x4x64xbf16> to vector<4x64xbf16>
    %c96 = arith.constant 96 : index
    %c0_81 = arith.constant 0 : index
    %74 = vector.load %arg7[%c96, %c0_81] : memref<208x64xbf16, #tpu.memory_space<vmem>>, vector<4x64xbf16>
    tpu.vector_store %arg7[%c96, %c0_81], %73 {strides = array<i32>} : memref<208x64xbf16, #tpu.memory_space<vmem>>, vector<4x64xbf16>,
    %c0_82 = arith.constant 0 : index
    %c0_83 = arith.constant 0 : index
    %c25 = arith.constant 25 : index
    %75 = vector.load %arg1[%c0_82, %c0_83, %c25] : memref<1x4x114xbf16, #tpu.memory_space<vmem>>, vector<1x4x64xbf16>
    %76 = vector.shape_cast %75 : vector<1x4x64xbf16> to vector<4x64xbf16>
    %c100 = arith.constant 100 : index
    %c0_84 = arith.constant 0 : index
    %77 = vector.load %arg7[%c100, %c0_84] : memref<208x64xbf16, #tpu.memory_space<vmem>>, vector<4x64xbf16>
    tpu.vector_store %arg7[%c100, %c0_84], %76 {strides = array<i32>} : memref<208x64xbf16, #tpu.memory_space<vmem>>, vector<4x64xbf16>,
    %c0_85 = arith.constant 0 : index
    %c0_86 = arith.constant 0 : index
    %c26 = arith.constant 26 : index
    %78 = vector.load %arg1[%c0_85, %c0_86, %c26] : memref<1x4x114xbf16, #tpu.memory_space<vmem>>, vector<1x4x64xbf16>
    %79 = vector.shape_cast %78 : vector<1x4x64xbf16> to vector<4x64xbf16>
    %c104 = arith.constant 104 : index
    %c0_87 = arith.constant 0 : index
    %80 = vector.load %arg7[%c104, %c0_87] : memref<208x64xbf16, #tpu.memory_space<vmem>>, vector<4x64xbf16>
    tpu.vector_store %arg7[%c104, %c0_87], %79 {strides = array<i32>} : memref<208x64xbf16, #tpu.memory_space<vmem>>, vector<4x64xbf16>,
    %c0_88 = arith.constant 0 : index
    %c0_89 = arith.constant 0 : index
    %c27 = arith.constant 27 : index
    %81 = vector.load %arg1[%c0_88, %c0_89, %c27] : memref<1x4x114xbf16, #tpu.memory_space<vmem>>, vector<1x4x64xbf16>
    %82 = vector.shape_cast %81 : vector<1x4x64xbf16> to vector<4x64xbf16>
    %c108 = arith.constant 108 : index
    %c0_90 = arith.constant 0 : index
    %83 = vector.load %arg7[%c108, %c0_90] : memref<208x64xbf16, #tpu.memory_space<vmem>>, vector<4x64xbf16>
    tpu.vector_store %arg7[%c108, %c0_90], %82 {strides = array<i32>} : memref<208x64xbf16, #tpu.memory_space<vmem>>, vector<4x64xbf16>,
    %c0_91 = arith.constant 0 : index
    %c0_92 = arith.constant 0 : index
    %c28_93 = arith.constant 28 : index
    %84 = vector.load %arg1[%c0_91, %c0_92, %c28_93] : memref<1x4x114xbf16, #tpu.memory_space<vmem>>, vector<1x4x64xbf16>
    %85 = vector.shape_cast %84 : vector<1x4x64xbf16> to vector<4x64xbf16>
    %c112 = arith.constant 112 : index
    %c0_94 = arith.constant 0 : index
    %86 = vector.load %arg7[%c112, %c0_94] : memref<208x64xbf16, #tpu.memory_space<vmem>>, vector<4x64xbf16>
    tpu.vector_store %arg7[%c112, %c0_94], %85 {strides = array<i32>} : memref<208x64xbf16, #tpu.memory_space<vmem>>, vector<4x64xbf16>,
    %c0_95 = arith.constant 0 : index
    %c0_96 = arith.constant 0 : index
    %c29 = arith.constant 29 : index
    %87 = vector.load %arg1[%c0_95, %c0_96, %c29] : memref<1x4x114xbf16, #tpu.memory_space<vmem>>, vector<1x4x64xbf16>
    %88 = vector.shape_cast %87 : vector<1x4x64xbf16> to vector<4x64xbf16>
    %c116 = arith.constant 116 : index
    %c0_97 = arith.constant 0 : index
    %89 = vector.load %arg7[%c116, %c0_97] : memref<208x64xbf16, #tpu.memory_space<vmem>>, vector<4x64xbf16>
    tpu.vector_store %arg7[%c116, %c0_97], %88 {strides = array<i32>} : memref<208x64xbf16, #tpu.memory_space<vmem>>, vector<4x64xbf16>,
    %c0_98 = arith.constant 0 : index
    %c0_99 = arith.constant 0 : index
    %c30 = arith.constant 30 : index
    %90 = vector.load %arg1[%c0_98, %c0_99, %c30] : memref<1x4x114xbf16, #tpu.memory_space<vmem>>, vector<1x4x64xbf16>
    %91 = vector.shape_cast %90 : vector<1x4x64xbf16> to vector<4x64xbf16>
    %c120 = arith.constant 120 : index
    %c0_100 = arith.constant 0 : index
    %92 = vector.load %arg7[%c120, %c0_100] : memref<208x64xbf16, #tpu.memory_space<vmem>>, vector<4x64xbf16>
    tpu.vector_store %arg7[%c120, %c0_100], %91 {strides = array<i32>} : memref<208x64xbf16, #tpu.memory_space<vmem>>, vector<4x64xbf16>,
    %c0_101 = arith.constant 0 : index
    %c0_102 = arith.constant 0 : index
    %c31 = arith.constant 31 : index
    %93 = vector.load %arg1[%c0_101, %c0_102, %c31] : memref<1x4x114xbf16, #tpu.memory_space<vmem>>, vector<1x4x64xbf16>
    %94 = vector.shape_cast %93 : vector<1x4x64xbf16> to vector<4x64xbf16>
    %c124 = arith.constant 124 : index
    %c0_103 = arith.constant 0 : index
    %95 = vector.load %arg7[%c124, %c0_103] : memref<208x64xbf16, #tpu.memory_space<vmem>>, vector<4x64xbf16>
    tpu.vector_store %arg7[%c124, %c0_103], %94 {strides = array<i32>} : memref<208x64xbf16, #tpu.memory_space<vmem>>, vector<4x64xbf16>,
    %c0_104 = arith.constant 0 : index
    %c0_105 = arith.constant 0 : index
    %c32_106 = arith.constant 32 : index
    %96 = vector.load %arg1[%c0_104, %c0_105, %c32_106] : memref<1x4x114xbf16, #tpu.memory_space<vmem>>, vector<1x4x64xbf16>
    %97 = vector.shape_cast %96 : vector<1x4x64xbf16> to vector<4x64xbf16>
    %c128 = arith.constant 128 : index
    %c0_107 = arith.constant 0 : index
    %98 = vector.load %arg7[%c128, %c0_107] : memref<208x64xbf16, #tpu.memory_space<vmem>>, vector<4x64xbf16>
    tpu.vector_store %arg7[%c128, %c0_107], %97 {strides = array<i32>} : memref<208x64xbf16, #tpu.memory_space<vmem>>, vector<4x64xbf16>,
    %c0_108 = arith.constant 0 : index
    %c0_109 = arith.constant 0 : index
    %c33 = arith.constant 33 : index
    %99 = vector.load %arg1[%c0_108, %c0_109, %c33] : memref<1x4x114xbf16, #tpu.memory_space<vmem>>, vector<1x4x64xbf16>
    %100 = vector.shape_cast %99 : vector<1x4x64xbf16> to vector<4x64xbf16>
    %c132 = arith.constant 132 : index
    %c0_110 = arith.constant 0 : index
    %101 = vector.load %arg7[%c132, %c0_110] : memref<208x64xbf16, #tpu.memory_space<vmem>>, vector<4x64xbf16>
    tpu.vector_store %arg7[%c132, %c0_110], %100 {strides = array<i32>} : memref<208x64xbf16, #tpu.memory_space<vmem>>, vector<4x64xbf16>,
    %c0_111 = arith.constant 0 : index
    %c0_112 = arith.constant 0 : index
    %c34 = arith.constant 34 : index
    %102 = vector.load %arg1[%c0_111, %c0_112, %c34] : memref<1x4x114xbf16, #tpu.memory_space<vmem>>, vector<1x4x64xbf16>
    %103 = vector.shape_cast %102 : vector<1x4x64xbf16> to vector<4x64xbf16>
    %c136 = arith.constant 136 : index
    %c0_113 = arith.constant 0 : index
    %104 = vector.load %arg7[%c136, %c0_113] : memref<208x64xbf16, #tpu.memory_space<vmem>>, vector<4x64xbf16>
    tpu.vector_store %arg7[%c136, %c0_113], %103 {strides = array<i32>} : memref<208x64xbf16, #tpu.memory_space<vmem>>, vector<4x64xbf16>,
    %c0_114 = arith.constant 0 : index
    %c0_115 = arith.constant 0 : index
    %c35 = arith.constant 35 : index
    %105 = vector.load %arg1[%c0_114, %c0_115, %c35] : memref<1x4x114xbf16, #tpu.memory_space<vmem>>, vector<1x4x64xbf16>
    %106 = vector.shape_cast %105 : vector<1x4x64xbf16> to vector<4x64xbf16>
    %c140 = arith.constant 140 : index
    %c0_116 = arith.constant 0 : index
    %107 = vector.load %arg7[%c140, %c0_116] : memref<208x64xbf16, #tpu.memory_space<vmem>>, vector<4x64xbf16>
    tpu.vector_store %arg7[%c140, %c0_116], %106 {strides = array<i32>} : memref<208x64xbf16, #tpu.memory_space<vmem>>, vector<4x64xbf16>,
    %c0_117 = arith.constant 0 : index
    %c0_118 = arith.constant 0 : index
    %c36_119 = arith.constant 36 : index
    %108 = vector.load %arg1[%c0_117, %c0_118, %c36_119] : memref<1x4x114xbf16, #tpu.memory_space<vmem>>, vector<1x4x64xbf16>
    %109 = vector.shape_cast %108 : vector<1x4x64xbf16> to vector<4x64xbf16>
    %c144 = arith.constant 144 : index
    %c0_120 = arith.constant 0 : index
    %110 = vector.load %arg7[%c144, %c0_120] : memref<208x64xbf16, #tpu.memory_space<vmem>>, vector<4x64xbf16>
    tpu.vector_store %arg7[%c144, %c0_120], %109 {strides = array<i32>} : memref<208x64xbf16, #tpu.memory_space<vmem>>, vector<4x64xbf16>,
    %c0_121 = arith.constant 0 : index
    %c0_122 = arith.constant 0 : index
    %c37 = arith.constant 37 : index
    %111 = vector.load %arg1[%c0_121, %c0_122, %c37] : memref<1x4x114xbf16, #tpu.memory_space<vmem>>, vector<1x4x64xbf16>
    %112 = vector.shape_cast %111 : vector<1x4x64xbf16> to vector<4x64xbf16>
    %c148 = arith.constant 148 : index
    %c0_123 = arith.constant 0 : index
    %113 = vector.load %arg7[%c148, %c0_123] : memref<208x64xbf16, #tpu.memory_space<vmem>>, vector<4x64xbf16>
    tpu.vector_store %arg7[%c148, %c0_123], %112 {strides = array<i32>} : memref<208x64xbf16, #tpu.memory_space<vmem>>, vector<4x64xbf16>,
    %c0_124 = arith.constant 0 : index
    %c0_125 = arith.constant 0 : index
    %c38 = arith.constant 38 : index
    %114 = vector.load %arg1[%c0_124, %c0_125, %c38] : memref<1x4x114xbf16, #tpu.memory_space<vmem>>, vector<1x4x64xbf16>
    %115 = vector.shape_cast %114 : vector<1x4x64xbf16> to vector<4x64xbf16>
    %c152 = arith.constant 152 : index
    %c0_126 = arith.constant 0 : index
    %116 = vector.load %arg7[%c152, %c0_126] : memref<208x64xbf16, #tpu.memory_space<vmem>>, vector<4x64xbf16>
    tpu.vector_store %arg7[%c152, %c0_126], %115 {strides = array<i32>} : memref<208x64xbf16, #tpu.memory_space<vmem>>, vector<4x64xbf16>,
    %c0_127 = arith.constant 0 : index
    %c0_128 = arith.constant 0 : index
    %c39 = arith.constant 39 : index
    %117 = vector.load %arg1[%c0_127, %c0_128, %c39] : memref<1x4x114xbf16, #tpu.memory_space<vmem>>, vector<1x4x64xbf16>
    %118 = vector.shape_cast %117 : vector<1x4x64xbf16> to vector<4x64xbf16>
    %c156 = arith.constant 156 : index
    %c0_129 = arith.constant 0 : index
    %119 = vector.load %arg7[%c156, %c0_129] : memref<208x64xbf16, #tpu.memory_space<vmem>>, vector<4x64xbf16>
    tpu.vector_store %arg7[%c156, %c0_129], %118 {strides = array<i32>} : memref<208x64xbf16, #tpu.memory_space<vmem>>, vector<4x64xbf16>,
    %c0_130 = arith.constant 0 : index
    %c0_131 = arith.constant 0 : index
    %c40_132 = arith.constant 40 : index
    %120 = vector.load %arg1[%c0_130, %c0_131, %c40_132] : memref<1x4x114xbf16, #tpu.memory_space<vmem>>, vector<1x4x64xbf16>
    %121 = vector.shape_cast %120 : vector<1x4x64xbf16> to vector<4x64xbf16>
    %c160 = arith.constant 160 : index
    %c0_133 = arith.constant 0 : index
    %122 = vector.load %arg7[%c160, %c0_133] : memref<208x64xbf16, #tpu.memory_space<vmem>>, vector<4x64xbf16>
    tpu.vector_store %arg7[%c160, %c0_133], %121 {strides = array<i32>} : memref<208x64xbf16, #tpu.memory_space<vmem>>, vector<4x64xbf16>,
    %c0_134 = arith.constant 0 : index
    %c0_135 = arith.constant 0 : index
    %c41 = arith.constant 41 : index
    %123 = vector.load %arg1[%c0_134, %c0_135, %c41] : memref<1x4x114xbf16, #tpu.memory_space<vmem>>, vector<1x4x64xbf16>
    %124 = vector.shape_cast %123 : vector<1x4x64xbf16> to vector<4x64xbf16>
    %c164 = arith.constant 164 : index
    %c0_136 = arith.constant 0 : index
    %125 = vector.load %arg7[%c164, %c0_136] : memref<208x64xbf16, #tpu.memory_space<vmem>>, vector<4x64xbf16>
    tpu.vector_store %arg7[%c164, %c0_136], %124 {strides = array<i32>} : memref<208x64xbf16, #tpu.memory_space<vmem>>, vector<4x64xbf16>,
    %c0_137 = arith.constant 0 : index
    %c0_138 = arith.constant 0 : index
    %c42 = arith.constant 42 : index
    %126 = vector.load %arg1[%c0_137, %c0_138, %c42] : memref<1x4x114xbf16, #tpu.memory_space<vmem>>, vector<1x4x64xbf16>
    %127 = vector.shape_cast %126 : vector<1x4x64xbf16> to vector<4x64xbf16>
    %c168 = arith.constant 168 : index
    %c0_139 = arith.constant 0 : index
    %128 = vector.load %arg7[%c168, %c0_139] : memref<208x64xbf16, #tpu.memory_space<vmem>>, vector<4x64xbf16>
    tpu.vector_store %arg7[%c168, %c0_139], %127 {strides = array<i32>} : memref<208x64xbf16, #tpu.memory_space<vmem>>, vector<4x64xbf16>,
    %c0_140 = arith.constant 0 : index
    %c0_141 = arith.constant 0 : index
    %c43 = arith.constant 43 : index
    %129 = vector.load %arg1[%c0_140, %c0_141, %c43] : memref<1x4x114xbf16, #tpu.memory_space<vmem>>, vector<1x4x64xbf16>
    %130 = vector.shape_cast %129 : vector<1x4x64xbf16> to vector<4x64xbf16>
    %c172 = arith.constant 172 : index
    %c0_142 = arith.constant 0 : index
    %131 = vector.load %arg7[%c172, %c0_142] : memref<208x64xbf16, #tpu.memory_space<vmem>>, vector<4x64xbf16>
    tpu.vector_store %arg7[%c172, %c0_142], %130 {strides = array<i32>} : memref<208x64xbf16, #tpu.memory_space<vmem>>, vector<4x64xbf16>,
    %c0_143 = arith.constant 0 : index
    %c0_144 = arith.constant 0 : index
    %c44_145 = arith.constant 44 : index
    %132 = vector.load %arg1[%c0_143, %c0_144, %c44_145] : memref<1x4x114xbf16, #tpu.memory_space<vmem>>, vector<1x4x64xbf16>
    %133 = vector.shape_cast %132 : vector<1x4x64xbf16> to vector<4x64xbf16>
    %c176 = arith.constant 176 : index
    %c0_146 = arith.constant 0 : index
    %134 = vector.load %arg7[%c176, %c0_146] : memref<208x64xbf16, #tpu.memory_space<vmem>>, vector<4x64xbf16>
    tpu.vector_store %arg7[%c176, %c0_146], %133 {strides = array<i32>} : memref<208x64xbf16, #tpu.memory_space<vmem>>, vector<4x64xbf16>,
    %c0_147 = arith.constant 0 : index
    %c0_148 = arith.constant 0 : index
    %c45 = arith.constant 45 : index
    %135 = vector.load %arg1[%c0_147, %c0_148, %c45] : memref<1x4x114xbf16, #tpu.memory_space<vmem>>, vector<1x4x64xbf16>
    %136 = vector.shape_cast %135 : vector<1x4x64xbf16> to vector<4x64xbf16>
    %c180 = arith.constant 180 : index
    %c0_149 = arith.constant 0 : index
    %137 = vector.load %arg7[%c180, %c0_149] : memref<208x64xbf16, #tpu.memory_space<vmem>>, vector<4x64xbf16>
    tpu.vector_store %arg7[%c180, %c0_149], %136 {strides = array<i32>} : memref<208x64xbf16, #tpu.memory_space<vmem>>, vector<4x64xbf16>,
    %c0_150 = arith.constant 0 : index
    %c0_151 = arith.constant 0 : index
    %c46 = arith.constant 46 : index
    %138 = vector.load %arg1[%c0_150, %c0_151, %c46] : memref<1x4x114xbf16, #tpu.memory_space<vmem>>, vector<1x4x64xbf16>
    %139 = vector.shape_cast %138 : vector<1x4x64xbf16> to vector<4x64xbf16>
    %c184 = arith.constant 184 : index
    %c0_152 = arith.constant 0 : index
    %140 = vector.load %arg7[%c184, %c0_152] : memref<208x64xbf16, #tpu.memory_space<vmem>>, vector<4x64xbf16>
    tpu.vector_store %arg7[%c184, %c0_152], %139 {strides = array<i32>} : memref<208x64xbf16, #tpu.memory_space<vmem>>, vector<4x64xbf16>,
    %c0_153 = arith.constant 0 : index
    %c0_154 = arith.constant 0 : index
    %c47 = arith.constant 47 : index
    %141 = vector.load %arg1[%c0_153, %c0_154, %c47] : memref<1x4x114xbf16, #tpu.memory_space<vmem>>, vector<1x4x64xbf16>
    %142 = vector.shape_cast %141 : vector<1x4x64xbf16> to vector<4x64xbf16>
    %c188 = arith.constant 188 : index
    %c0_155 = arith.constant 0 : index
    %143 = vector.load %arg7[%c188, %c0_155] : memref<208x64xbf16, #tpu.memory_space<vmem>>, vector<4x64xbf16>
    tpu.vector_store %arg7[%c188, %c0_155], %142 {strides = array<i32>} : memref<208x64xbf16, #tpu.memory_space<vmem>>, vector<4x64xbf16>,
    %c0_156 = arith.constant 0 : index
    %c0_157 = arith.constant 0 : index
    %c48_158 = arith.constant 48 : index
    %144 = vector.load %arg1[%c0_156, %c0_157, %c48_158] : memref<1x4x114xbf16, #tpu.memory_space<vmem>>, vector<1x4x64xbf16>
    %145 = vector.shape_cast %144 : vector<1x4x64xbf16> to vector<4x64xbf16>
    %c192 = arith.constant 192 : index
    %c0_159 = arith.constant 0 : index
    %146 = vector.load %arg7[%c192, %c0_159] : memref<208x64xbf16, #tpu.memory_space<vmem>>, vector<4x64xbf16>
    tpu.vector_store %arg7[%c192, %c0_159], %145 {strides = array<i32>} : memref<208x64xbf16, #tpu.memory_space<vmem>>, vector<4x64xbf16>,
    %c0_160 = arith.constant 0 : index
    %c0_161 = arith.constant 0 : index
    %c49 = arith.constant 49 : index
    %147 = vector.load %arg1[%c0_160, %c0_161, %c49] : memref<1x4x114xbf16, #tpu.memory_space<vmem>>, vector<1x4x64xbf16>
    %148 = vector.shape_cast %147 : vector<1x4x64xbf16> to vector<4x64xbf16>
    %c196 = arith.constant 196 : index
    %c0_162 = arith.constant 0 : index
    %149 = vector.load %arg7[%c196, %c0_162] : memref<208x64xbf16, #tpu.memory_space<vmem>>, vector<4x64xbf16>
    tpu.vector_store %arg7[%c196, %c0_162], %148 {strides = array<i32>} : memref<208x64xbf16, #tpu.memory_space<vmem>>, vector<4x64xbf16>,
    %c0_163 = arith.constant 0 : index
    %c0_164 = arith.constant 0 : index
    %c50 = arith.constant 50 : index
    %150 = vector.load %arg1[%c0_163, %c0_164, %c50] : memref<1x4x114xbf16, #tpu.memory_space<vmem>>, vector<1x4x64xbf16>
    %151 = vector.shape_cast %150 : vector<1x4x64xbf16> to vector<4x64xbf16>
    %c200 = arith.constant 200 : index
    %c0_165 = arith.constant 0 : index
    %152 = vector.load %arg7[%c200, %c0_165] : memref<208x64xbf16, #tpu.memory_space<vmem>>, vector<4x64xbf16>
    tpu.vector_store %arg7[%c200, %c0_165], %151 {strides = array<i32>} : memref<208x64xbf16, #tpu.memory_space<vmem>>, vector<4x64xbf16>,
    %153 = tpu.iota {dimensions = array<i32: 0>} : vector<4x64xi32>
    %c0_i32 = arith.constant 0 : i32
    %154 = vector.broadcast %c0_i32 : i32 to vector<4x64xi32>
    %155 = arith.cmpi eq, %153, %154 : vector<4x64xi32>
    %cst = arith.constant 1.000000e+00 : f32
    %cst_166 = arith.constant 0.000000e+00 : f32
    %156 = vector.broadcast %cst : f32 to vector<4x64xf32>
    %157 = vector.broadcast %cst_166 : f32 to vector<4x64xf32>
    %158 = arith.select %155, %156, %157 : vector<4x64xi1>, vector<4x64xf32>
    %159 = arith.truncf %158 : vector<4x64xf32> to vector<4x64xbf16>
    %c204 = arith.constant 204 : index
    %c0_167 = arith.constant 0 : index
    %160 = vector.load %arg7[%c204, %c0_167] : memref<208x64xbf16, #tpu.memory_space<vmem>>, vector<4x64xbf16>
    tpu.vector_store %arg7[%c204, %c0_167], %159 {strides = array<i32>} : memref<208x64xbf16, #tpu.memory_space<vmem>>, vector<4x64xbf16>,
    %c0_168 = arith.constant 0 : index
    %c0_169 = arith.constant 0 : index
    %161 = vector.load %arg2[%c0_168, %c0_169] : memref<20x208xbf16, #tpu.memory_space<vmem>>, vector<20x208xbf16>
    %c0_170 = arith.constant 0 : index
    %c0_171 = arith.constant 0 : index
    %162 = vector.load %arg7[%c0_170, %c0_171] : memref<208x64xbf16, #tpu.memory_space<vmem>>, vector<208x64xbf16>
    %cst_172 = arith.constant dense<0.000000e+00> : vector<20x64xf32>
    %163 = tpu.matmul %161, %162, %cst_172 {dimension_numbers = #tpu.dot_dimension_numbers<[1], [0], [0], [1], [0, 0, 1, 1], [], []>} : vector<20x208xbf16>, vector<208x64xbf16>, vector<20x64xf32> -> vector<20x64xf32>
    %164 = arith.negf %163 : vector<20x64xf32>
    %165 = math.exp %164 : vector<20x64xf32>
    %cst_173 = arith.constant 1.000000e+00 : f32
    %166 = vector.broadcast %cst_173 : f32 to vector<20x64xf32>
    %167 = arith.addf %166, %165 : vector<20x64xf32>
    %168 = arith.divf %166, %167 : vector<20x64xf32>
    %cst_174 = arith.constant dense<0.000000e+00> : vector<20xf32>
    %169 = vector.multi_reduction <add>, %168, %cst_174 [1] : vector<20x64xf32> to vector<20xf32>
    %170 = vector.shape_cast %169 : vector<20xf32> to vector<20x1xf32>
    %cst_175 = arith.constant 6.400000e+01 : f32
    %171 = vector.broadcast %cst_175 : f32 to vector<20x1xf32>
    %172 = arith.divf %170, %171 : vector<20x1xf32>
    %c0_176 = arith.constant 0 : index
    %c0_177 = arith.constant 0 : index
    %173 = vector.load %arg3[%c0_176, %c0_177] : memref<20x20xf32, #tpu.memory_space<vmem>>, vector<20x20xf32>
    %174 = vector.broadcast %172 : vector<20x1xf32> to vector<20x20xf32>
    %175 = arith.mulf %173, %174 : vector<20x20xf32>
    %cst_178 = arith.constant dense<0.000000e+00> : vector<20xf32>
    %176 = vector.multi_reduction <add>, %175, %cst_178 [0] : vector<20x20xf32> to vector<20xf32>
    %177 = vector.shape_cast %176 : vector<20xf32> to vector<1x20xf32>
    %178 = tpu.iota {dimensions = array<i32: 1>} : vector<1x20xi32>
    %c12_i32 = arith.constant 12 : i32
    %179 = vector.broadcast %c12_i32 : i32 to vector<1x20xi32>
    %180 = arith.cmpi slt, %178, %179 : vector<1x20xi32>
    %181 = arith.negf %177 : vector<1x20xf32>
    %182 = math.exp %181 : vector<1x20xf32>
    %cst_179 = arith.constant 1.000000e+00 : f32
    %183 = vector.broadcast %cst_179 : f32 to vector<1x20xf32>
    %184 = arith.addf %183, %182 : vector<1x20xf32>
    %185 = arith.divf %183, %184 : vector<1x20xf32>
    %cst_180 = arith.constant 1.000000e+00 : f32
    %186 = vector.broadcast %cst_180 : f32 to vector<1x20xf32>
    %187 = arith.select %180, %185, %186 : vector<1x20xi1>, vector<1x20xf32>
    %c0_181 = arith.constant 0 : index
    %c0_182 = arith.constant 0 : index
    %188 = vector.load %arg4[%c0_181, %c0_182] : memref<20x20xf32, #tpu.memory_space<vmem>>, vector<20x20xf32>
    %189 = vector.broadcast %187 : vector<1x20xf32> to vector<20x20xf32>
    %190 = arith.mulf %188, %189 : vector<20x20xf32>
    %191 = arith.truncf %190 : vector<20x20xf32> to vector<20x20xbf16>
    %192 = arith.truncf %168 : vector<20x64xf32> to vector<20x64xbf16>
    %cst_183 = arith.constant dense<0.000000e+00> : vector<20x64xf32>
    %193 = tpu.matmul %191, %192, %cst_183 {dimension_numbers = #tpu.dot_dimension_numbers<[1], [0], [0], [1], [0, 0, 1, 1], [], []>} : vector<20x20xbf16>, vector<20x64xbf16>, vector<20x64xf32> -> vector<20x64xf32>
    %c0_184 = arith.constant 0 : index
    %c0_185 = arith.constant 0 : index
    %194 = vector.load %arg5[%c0_184, %c0_185] : memref<20x8xf32, #tpu.memory_space<vmem>>, vector<20x8xf32>
    %195 = vector.extract_strided_slice %194 {offsets = [0, 0], sizes = [20, 1], strides = [1, 1]} : vector<20x8xf32> to vector<20x1xf32>
    %196 = vector.broadcast %195 : vector<20x1xf32> to vector<20x64xf32>
    %197 = arith.addf %193, %196 : vector<20x64xf32>
    %198 = arith.truncf %197 : vector<20x64xf32> to vector<20x64xbf16>
    %199 = arith.negf %198 : vector<20x64xbf16>
    %200 = math.exp %199 : vector<20x64xbf16>
    %cst_186 = arith.constant 1.000000e+00 : bf16
    %201 = vector.broadcast %cst_186 : bf16 to vector<20x64xbf16>
    %202 = arith.addf %201, %200 : vector<20x64xbf16>
    %203 = arith.divf %201, %202 : vector<20x64xbf16>
    %204 = arith.extf %203 : vector<20x64xbf16> to vector<20x64xf32>
    %205 = arith.mulf %197, %204 : vector<20x64xf32>
    %206 = vector.extract_strided_slice %194 {offsets = [0, 1], sizes = [20, 1], strides = [1, 1]} : vector<20x8xf32> to vector<20x1xf32>
    %207 = vector.broadcast %206 : vector<20x1xf32> to vector<20x64xf32>
    %208 = arith.mulf %205, %207 : vector<20x64xf32>
    %209 = vector.extract_strided_slice %194 {offsets = [0, 2], sizes = [20, 1], strides = [1, 1]} : vector<20x8xf32> to vector<20x1xf32>
    %210 = vector.broadcast %209 : vector<20x1xf32> to vector<20x64xf32>
    %211 = arith.addf %208, %210 : vector<20x64xf32>
    %212 = vector.extract_strided_slice %194 {offsets = [0, 3], sizes = [20, 1], strides = [1, 1]} : vector<20x8xf32> to vector<20x1xf32>
    %213 = vector.broadcast %212 : vector<20x1xf32> to vector<20x64xf32>
    %214 = arith.mulf %205, %213 : vector<20x64xf32>
    %215 = vector.extract_strided_slice %194 {offsets = [0, 4], sizes = [20, 1], strides = [1, 1]} : vector<20x8xf32> to vector<20x1xf32>
    %216 = vector.broadcast %215 : vector<20x1xf32> to vector<20x64xf32>
    %217 = arith.addf %214, %216 : vector<20x64xf32>
    %218 = arith.truncf %211 : vector<20x64xf32> to vector<20x64xbf16>
    %219 = arith.negf %218 : vector<20x64xbf16>
    %220 = math.exp %219 : vector<20x64xbf16>
    %cst_187 = arith.constant 1.000000e+00 : bf16
    %221 = vector.broadcast %cst_187 : bf16 to vector<20x64xbf16>
    %222 = arith.addf %221, %220 : vector<20x64xbf16>
    %223 = arith.divf %221, %222 : vector<20x64xbf16>
    %224 = arith.extf %223 : vector<20x64xbf16> to vector<20x64xf32>
    %225 = arith.mulf %211, %224 : vector<20x64xf32>
    %226 = arith.truncf %217 : vector<20x64xf32> to vector<20x64xbf16>
    %227 = arith.negf %226 : vector<20x64xbf16>
    %228 = math.exp %227 : vector<20x64xbf16>
    %cst_188 = arith.constant 1.000000e+00 : bf16
    %229 = vector.broadcast %cst_188 : bf16 to vector<20x64xbf16>
    %230 = arith.addf %229, %228 : vector<20x64xbf16>
    %231 = arith.divf %229, %230 : vector<20x64xbf16>
    %232 = arith.extf %231 : vector<20x64xbf16> to vector<20x64xf32>
    %233 = arith.mulf %217, %232 : vector<20x64xf32>
    %234 = arith.addf %225, %233 : vector<20x64xf32>
    %235 = arith.addf %234, %205 : vector<20x64xf32>
    %c0_189 = arith.constant 0 : index
    %c0_190 = arith.constant 0 : index
    %c0_191 = arith.constant 0 : index
    %236 = vector.load %arg6[%c0_189, %c0_190, %c0_191] : memref<1x20x64xf32, #tpu.memory_space<vmem>>, vector<1x20x64xf32>
    %237 = vector.shape_cast %236 : vector<1x20x64xf32> to vector<20x64xf32>
    %238 = vector.shape_cast %235 : vector<20x64xf32> to vector<1x20x64xf32>
    tpu.vector_store %arg6[%c0_189, %c0_190, %c0_191], %238 {strides = array<i32>} : memref<1x20x64xf32, #tpu.memory_space<vmem>>, vector<1x20x64xf32>,
    return
  }
  func.func @transform_0(%arg0: i32) -> (i32, i32, i32) {
    %c0_i32 = arith.constant 0 : i32
    %c0_i32_0 = arith.constant 0 : i32
    %c0_i32_1 = arith.constant 0 : i32
    return %arg0, %c0_i32, %c0_i32_0 : i32, i32, i32
  }
  func.func @transform_1(%arg0: i32) -> (i32, i32) {
    %c0_i32 = arith.constant 0 : i32
    %c0_i32_0 = arith.constant 0 : i32
    %c0_i32_1 = arith.constant 0 : i32
    return %c0_i32, %c0_i32_0 : i32, i32
  }
  func.func @transform_2(%arg0: i32) -> (i32, i32) {
    %c0_i32 = arith.constant 0 : i32
    %c0_i32_0 = arith.constant 0 : i32
    %c0_i32_1 = arith.constant 0 : i32
    return %c0_i32, %c0_i32_0 : i32, i32
  }
  func.func @transform_3(%arg0: i32) -> (i32, i32) {
    %c0_i32 = arith.constant 0 : i32
    %c0_i32_0 = arith.constant 0 : i32
    %c0_i32_1 = arith.constant 0 : i32
    return %c0_i32, %c0_i32_0 : i32, i32
  }
  func.func @transform_4(%arg0: i32) -> (i32, i32) {
    %c0_i32 = arith.constant 0 : i32
    %c0_i32_0 = arith.constant 0 : i32
    %c0_i32_1 = arith.constant 0 : i32
    return %c0_i32, %c0_i32_0 : i32, i32
  }
  func.func @transform_5(%arg0: i32) -> (i32, i32, i32) {
    %c0_i32 = arith.constant 0 : i32
    %c0_i32_0 = arith.constant 0 : i32
    %c0_i32_1 = arith.constant 0 : i32
    return %arg0, %c0_i32, %c0_i32_0 : i32, i32, i32
  }
}

</mosaic_0001>

<llo_original>
// kernel: _lambda_.1
$region0: #{_lambda_.1}
  #allocation0 [shape = 'u32[]', space=smem, size = 0x4, offset = 0x4, fixed_abs, tag = 'smem constant byte address 0x4 - core index']
  #allocation1 [shape = 'u32[144,128]{1,0:T(1,128)}', space=vmem, size = 0x12000, scoped, tag = 'internal scratch']
  #allocation2 [shape = 'bf16[208,64]{1,0:T(16,128)(2,1)}', space=vmem, size = 0xd000, scoped, tag = 'scratch operand']
  %s0 = inlined_call_operand.vmem [shape: bf16[2,4,114], index: 0, kind: input, shape index: {}]
  %s1 = inlined_call_operand.hbm [shape: bf16[20,208], index: 1, kind: input, shape index: {}]
  %s2 = inlined_call_operand.hbm [shape: f32[20,20], index: 2, kind: input, shape index: {}]
  %s3 = inlined_call_operand.hbm [shape: f32[20,20], index: 3, kind: input, shape index: {}]
  %s4 = inlined_call_operand.vmem [shape: f32[20,8], index: 4, kind: input, shape index: {}]
  %s5 = inlined_call_operand.vmem [shape: f32[2,20,64], index: 5, kind: output, shape index: {}]
  %s6 = sld [smem:[#allocation0]]
  $region65: #{_lambda_.1} parent=0
    _
  %s8 = ssub.s32 1, %s6
  %s9 = scalar_select 0, %s8, %s6
  $region1: #{_lambda_.1} parent=0
    #allocation3 [shape = 'u8[12288]{0}', space=vmem, size = 0x3000, scoped, tag = 'input window, operand 1, single buffered']
    #allocation4 [shape = 's32[2]{0}', space=sflag, size = 0x8, scoped, tag = 'scoped memory for _lambda_.1']
    #allocation5 [shape = 'u8[12288]{0}', space=vmem, size = 0x3000, scoped, tag = 'input window, operand 2, single buffered']
    #allocation6 [shape = 's32[1]{0}', space=sflag, size = 0x4, scoped, tag = 'scoped memory for _lambda_.1']
    #allocation7 [shape = 'u8[12288]{0}', space=vmem, size = 0x3000, scoped, tag = 'input window, operand 3, single buffered']
    %10 = vsyncpa [#allocation4], 0
    %11 = vsyncpa [#allocation6], 0
    loop: start=0, step=1, limit=4
    $region2: #{_lambda_.1} parent=1 // loop_pre_header
      _
    $region3: #{_lambda_.1} parent=1 // loop_header
      %s13 = sphi 0, %s17
      %p14 = scmp.ge.s32.totalorder %s13, 4
      %s23 = sphi 0, %s25
      %s26 = sphi 0, %s23
      %s27 = sphi 0, %s26
      %s43 = sphi 0, %s27
      %s47 = sphi 0, %s47
      %s49 = sphi 0, %s47
      %s50 = sphi 0, %s49
      %s64 = sphi 0, %s50
      %s68 = sphi 0, %s68
      %s70 = sphi 0, %s68
      %s71 = sphi 0, %s70
      %s85 = sphi 0, %s71
      %s89 = sphi 0, %s89
      %s91 = sphi 0, %s89
      %s92 = sphi 0, %s91
      %s106 = sphi 0, %s92
      %s110 = sphi 0, %s110
      %s112 = sphi 0, %s110
      %s113 = sphi 0, %s112
      %s127 = sphi 0, %s113
      %s133 = sphi 0, %s135
      %s136 = sphi 0, %s133
      %s137 = sphi 0, %s136
      %s153 = sphi 0, %s137
    $region4: #{_lambda_.1} parent=1 // loop_header_branch
      %16 = sbr.rel (%p14) target = $region8
    $region5: #{_lambda_.1} parent=1 // loop_body
      %s18 = ssub.s32 %s13, 1
      %s19 = ssub.s32 %s13, 2
      %s20 = sadd.s32 %s13, 1
      %s21 = ssub.s32 %s13, %s20
      %p22 = scmp.eq.s32.totalorder %s21, 0
      %s24 = sadd.s32 %s23, 1
      %s25 = scalar_select %p22, %s23, %s24
      %p28 = pneg %p22
      %p29 = scmp.eq.s32.totalorder %s13, 1
      %p30 = por %p28, %p29
      %p31 = scmp.ne.s32.totalorder %s23, %s26
      %p32 = scmp.eq.s32.totalorder %s13, 0
      %p33 = por %p31, %p32
      %p34 = scmp.ne.s32.totalorder %s23, %s26
      %p35 = scmp.eq.s32.totalorder %s18, 1
      %p36 = por %p34, %p35
      %p37 = scmp.ne.s32.totalorder %s26, %s27
      %p38 = scmp.eq.s32.totalorder %s18, 0
      %p39 = por %p37, %p38
      %p40 = scmp.ne.s32.totalorder %s26, %s27
      %p41 = scmp.eq.s32.totalorder %s19, 1
      %p42 = por %p40, %p41
      %p44 = scmp.ne.s32.totalorder %s27, %s43
      %p45 = scmp.eq.s32.totalorder %s19, 0
      %p46 = por %p44, %p45
      %s48 = sadd.s32 %s47, 1
      %p51 = scmp.eq.s32.totalorder %s13, 1
      %p52 = scmp.ne.s32.totalorder %s47, %s49
      %p53 = scmp.eq.s32.totalorder %s13, 0
      %p54 = por %p52, %p53
      %p55 = scmp.ne.s32.totalorder %s47, %s49
      %p56 = scmp.eq.s32.totalorder %s18, 1
      %p57 = por %p55, %p56
      %p58 = scmp.ne.s32.totalorder %s49, %s50
      %p59 = scmp.eq.s32.totalorder %s18, 0
      %p60 = por %p58, %p59
      %p61 = scmp.ne.s32.totalorder %s49, %s50
      %p62 = scmp.eq.s32.totalorder %s19, 1
      %p63 = por %p61, %p62
      %p65 = scmp.ne.s32.totalorder %s50, %s64
      %p66 = scmp.eq.s32.totalorder %s19, 0
      %p67 = por %p65, %p66
      %s69 = sadd.s32 %s68, 1
      %p72 = scmp.eq.s32.totalorder %s13, 1
      %p73 = scmp.ne.s32.totalorder %s68, %s70
      %p74 = scmp.eq.s32.totalorder %s13, 0
      %p75 = por %p73, %p74
      %p76 = scmp.ne.s32.totalorder %s68, %s70
      %p77 = scmp.eq.s32.totalorder %s18, 1
      %p78 = por %p76, %p77
      %p79 = scmp.ne.s32.totalorder %s70, %s71
      %p80 = scmp.eq.s32.totalorder %s18, 0
      %p81 = por %p79, %p80
      %p82 = scmp.ne.s32.totalorder %s70, %s71
      %p83 = scmp.eq.s32.totalorder %s19, 1
      %p84 = por %p82, %p83
      %p86 = scmp.ne.s32.totalorder %s71, %s85
      %p87 = scmp.eq.s32.totalorder %s19, 0
      %p88 = por %p86, %p87
      %s90 = sadd.s32 %s89, 1
      %p93 = scmp.eq.s32.totalorder %s13, 1
      %p94 = scmp.ne.s32.totalorder %s89, %s91
      %p95 = scmp.eq.s32.totalorder %s13, 0
      %p96 = por %p94, %p95
      %p97 = scmp.ne.s32.totalorder %s89, %s91
      %p98 = scmp.eq.s32.totalorder %s18, 1
      %p99 = por %p97, %p98
      %p100 = scmp.ne.s32.totalorder %s91, %s92
      %p101 = scmp.eq.s32.totalorder %s18, 0
      %p102 = por %p100, %p101
      %p103 = scmp.ne.s32.totalorder %s91, %s92
      %p104 = scmp.eq.s32.totalorder %s19, 1
      %p105 = por %p103, %p104
      %p107 = scmp.ne.s32.totalorder %s92, %s106
      %p108 = scmp.eq.s32.totalorder %s19, 0
      %p109 = por %p107, %p108
      %s111 = sadd.s32 %s110, 1
      %p114 = scmp.eq.s32.totalorder %s13, 1
      %p115 = scmp.ne.s32.totalorder %s110, %s112
      %p116 = scmp.eq.s32.totalorder %s13, 0
      %p117 = por %p115, %p116
      %p118 = scmp.ne.s32.totalorder %s110, %s112
      %p119 = scmp.eq.s32.totalorder %s18, 1
      %p120 = por %p118, %p119
      %p121 = scmp.ne.s32.totalorder %s112, %s113
      %p122 = scmp.eq.s32.totalorder %s18, 0
      %p123 = por %p121, %p122
      %p124 = scmp.ne.s32.totalorder %s112, %s113
      %p125 = scmp.eq.s32.totalorder %s19, 1
      %p126 = por %p124, %p125
      %p128 = scmp.ne.s32.totalorder %s113, %s127
      %p129 = scmp.eq.s32.totalorder %s19, 0
      %p130 = por %p128, %p129
      %s131 = ssub.s32 %s13, %s20
      %p132 = scmp.eq.s32.totalorder %s131, 0
      %s134 = sadd.s32 %s133, 1
      %s135 = scalar_select %p132, %s133, %s134
      %p138 = pneg %p132
      %p139 = scmp.eq.s32.totalorder %s13, 1
      %p140 = por %p138, %p139
      %p141 = scmp.ne.s32.totalorder %s133, %s136
      %p142 = scmp.eq.s32.totalorder %s13, 0
      %p143 = por %p141, %p142
      %p144 = scmp.ne.s32.totalorder %s133, %s136
      %p145 = scmp.eq.s32.totalorder %s18, 1
      %p146 = por %p144, %p145
      %p147 = scmp.ne.s32.totalorder %s136, %s137
      %p148 = scmp.eq.s32.totalorder %s18, 0
      %p149 = por %p147, %p148
      %p150 = scmp.ne.s32.totalorder %s136, %s137
      %p151 = scmp.eq.s32.totalorder %s19, 1
      %p152 = por %p150, %p151
      %p154 = scmp.ne.s32.totalorder %s137, %s153
      %p155 = scmp.eq.s32.totalorder %s19, 0
      %p156 = por %p154, %p155
      %p157 = scmp.le.s32.totalorder 1, %s13
      %p158 = scmp.lt.s32.totalorder %s13, 3
      %p159 = pnand %p157, %p158
      %p160 = pneg %p159
      // Predicated region
      $region9: #{_lambda_.1} parent=5 // pred_check
        _
      $region10: #{_lambda_.1} parent=5 // pred_check_branch
        %162 = sbr.rel (%p159) target = $region12
      $region11: #{_lambda_.1} parent=5 // pred_region
        %s163 = ssub.s32 %s13, 1
        // Predicated region
        $region13: #{_lambda_.1} parent=11 // pred_check
          %p164 = pneg %p60
        $region14: #{_lambda_.1} parent=11 // pred_check_branch
          %166 = sbr.rel (%p164) target = $region16
        $region15: #{_lambda_.1} parent=11 // pred_region
          %s168 = ssub.s32 384, 384
          %169 = vsyncadd [#allocation4], %s168
          %s170 = sshll.u32 [#allocation3], 4
          %s171 = int_to_ptr.vmem [resolvable:$true] %s170
          %176 = dma.hbm_to_vmem [thread:$0]  %s1, 384, %s171, [#allocation4], 128, 128, 8
        $region16: #{_lambda_.1} parent=11 // pred_fallthru
          _
        // Predicated region
        $region17: #{_lambda_.1} parent=11 // pred_check
          %p177 = pneg %p81
        $region18: #{_lambda_.1} parent=11 // pred_check_branch
          %179 = sbr.rel (%p177) target = $region20
        $region19: #{_lambda_.1} parent=11 // pred_region
          %s181 = ssub.s32 384, 384
          %182 = vsyncadd [#allocation6], %s181
          %s183 = sshll.u32 [#allocation5], 4
          %s184 = int_to_ptr.vmem [resolvable:$true] %s183
          %189 = dma.hbm_to_vmem [thread:$0]  %s2, 384, %s184, [#allocation6], 128, 128, 8
        $region20: #{_lambda_.1} parent=11 // pred_fallthru
          _
        // Predicated region
        $region21: #{_lambda_.1} parent=11 // pred_check
          %p190 = pneg %p102
        $region22: #{_lambda_.1} parent=11 // pred_check_branch
          %192 = sbr.rel (%p190) target = $region24
        $region23: #{_lambda_.1} parent=11 // pred_region
          %s194 = ssub.s32 384, 384
          %195 = vsyncadd [#allocation6], %s194
          %s196 = sshll.u32 [#allocation7], 4
          %s197 = int_to_ptr.vmem [resolvable:$true] %s196
          %202 = dma.hbm_to_vmem [thread:$0]  %s3, 384, %s197, [#allocation6], 128, 128, 8
        $region24: #{_lambda_.1} parent=11 // pred_fallthru
          _
        // Predicated region
        $region25: #{_lambda_.1} parent=11 // pred_check
          %p203 = pneg %p123
        $region26: #{_lambda_.1} parent=11 // pred_check_branch
          %205 = sbr.rel (%p203) target = $region28
        $region27: #{_lambda_.1} parent=11 // pred_region
          _
        $region28: #{_lambda_.1} parent=11 // pred_fallthru
          _
      $region12: #{_lambda_.1} parent=5 // pred_fallthru
        _
      %p206 = scmp.lt.s32.totalorder %s13, 2
      // Predicated region
      $region29: #{_lambda_.1} parent=5 // pred_check
        %p207 = pneg %p206
      $region30: #{_lambda_.1} parent=5 // pred_check_branch
        %209 = sbr.rel (%p207) target = $region32
      $region31: #{_lambda_.1} parent=5 // pred_region
        // Predicated region
        $region33: #{_lambda_.1} parent=31 // pred_check
          %p210 = pneg %p33
        $region34: #{_lambda_.1} parent=31 // pred_check_branch
          %212 = sbr.rel (%p210) target = $region36
        $region35: #{_lambda_.1} parent=31 // pred_region
          %p213 = scmp.lt.s32.totalorder %s13, 1
          %s214 = scalar_select %p213, %s13, 1
          %s215 = smul.addr %s214, 2
          %s216 = scalar_lea.vmem %s0, %s215
        $region36: #{_lambda_.1} parent=31 // pred_fallthru
          _
      $region32: #{_lambda_.1} parent=5 // pred_fallthru
        _
      %p217 = scmp.le.s32.totalorder 1, %s13
      %p218 = scmp.lt.s32.totalorder %s13, 3
      %p219 = pnand %p217, %p218
      %p220 = pneg %p219
      // Predicated region
      $region37: #{_lambda_.1} parent=5 // pred_check
        _
      $region38: #{_lambda_.1} parent=5 // pred_check_branch
        %222 = sbr.rel (%p219) target = $region40
      $region39: #{_lambda_.1} parent=5 // pred_region
        %s223 = ssub.s32 %s13, 1
        // Predicated region
        $region41: #{_lambda_.1} parent=39 // pred_check
          %p224 = pneg %p60
        $region42: #{_lambda_.1} parent=39 // pred_check_branch
          %226 = sbr.rel (%p224) target = $region44
        $region43: #{_lambda_.1} parent=39 // pred_region
          %227 = dma.done [#allocation4], 384
        $region44: #{_lambda_.1} parent=39 // pred_fallthru
          _
        // Predicated region
        $region45: #{_lambda_.1} parent=39 // pred_check
          %p228 = pneg %p81
        $region46: #{_lambda_.1} parent=39 // pred_check_branch
          %230 = sbr.rel (%p228) target = $region48
        $region47: #{_lambda_.1} parent=39 // pred_region
          %231 = dma.done [#allocation6], 384
        $region48: #{_lambda_.1} parent=39 // pred_fallthru
          _
        // Predicated region
        $region49: #{_lambda_.1} parent=39 // pred_check
          %p232 = pneg %p102
        $region50: #{_lambda_.1} parent=39 // pred_check_branch
          %234 = sbr.rel (%p232) target = $region52
        $region51: #{_lambda_.1} parent=39 // pred_region
          %235 = dma.done [#allocation6], 384
        $region52: #{_lambda_.1} parent=39 // pred_fallthru
          _
        %p236 = scmp.lt.s32.totalorder %s18, 1
        %s237 = scalar_select %p236, %s18, 1
        %s238 = smul.addr %s237, 2
        %s239 = scalar_lea.vmem %s0, %s238
        %p240 = pneg %p39
        %p241 = pneg %p36
        %p242 = pneg %p60
        %p243 = pneg %p57
        %p244 = pneg %p81
        %p245 = pneg %p78
        %p246 = pneg %p102
        %p247 = pneg %p99
        %p248 = pneg %p123
        %p249 = pneg %p120
        %p250 = pneg %p149
        %p251 = pneg %p146
        %p252 = scmp.lt.s32.totalorder %s18, 1
        %s253 = scalar_select %p252, %s18, 1
        %s254 = smul.addr %s253, 3
        %s255 = smul.addr %s254, 8
        %s256 = scalar_lea.vmem %s5, %s255
        %p257 = scmp.lt.s32.totalorder %s18, 1
        %s258 = scalar_select %p257, %s18, 1
        %s259 = smul.addr %s258, 2
        %s260 = scalar_lea.vmem %s0, %s259
        %p261 = scmp.lt.s32.totalorder %s18, 1
        %s262 = scalar_select %p261, %s18, 1
        %s263 = smul.addr %s262, 3
        %s264 = smul.addr %s263, 8
        %s265 = scalar_lea.vmem %s5, %s264
        %v268 = vld [vmem:[%s260] sm:$0x3]
        %vm269 = vcmask 517120
        %270 = vst.msk [vmem:[#allocation2] sm:$0x3] %vm269, %v268
        %v271 = vld [vmem:[%s260] sm:$0x3]
        %v273 = vcombine.low %v271, %v271
        %v275 = vunpack.c.l.s4 1983009808
        %v276 = vunpack.c.0.s8 %v275
        %v277 = vlaneseq
        %v278 = vshrl.u32 %v277, 7
        %v279 = vsub.s32 %v276, %v278
        %v280 = vrot.slane %v273, %v279
        %281 = vrot.lane.b32.xlu0 %v280, 127
        %v282 = vpop.permute.xlu0 %281
        %vm284 = vcmask 519170
        %285 = vst.msk [vmem:[#allocation2] sm:$0xc] %vm284, %v282
        %v286 = vld [vmem:[%s260] sm:$0x3]
        %v289 = vunpack.c.l.s4 1983009808
        %v290 = vunpack.c.0.s8 %v289
        %v291 = vlaneseq
        %v292 = vshrl.u32 %v291, 7
        %v293 = vsub.s32 %v290, %v292
        %v294 = vrot.slane %v286, %v293
        %v295 = vcombine.low %v294, %v294
        %296 = vrot.lane.b32.xlu0 %v295, 126
        %v297 = vpop.permute.xlu0 %296
        %vm299 = vcmask 521220
        %300 = vst.msk [vmem:[#allocation2] sm:$0x30] %vm299, %v297
        %v301 = vld [vmem:[%s260] sm:$0x3]
        %v303 = vcombine.low %v301, %v301
        %v305 = vunpack.c.l.s4 1983009808
        %v306 = vunpack.c.0.s8 %v305
        %v307 = vlaneseq
        %v308 = vshrl.u32 %v307, 7
        %v309 = vsub.s32 %v306, %v308
        %v310 = vrot.slane %v303, %v309
        %v311 = vcombine.low %v310, %v310
        %312 = vrot.lane.b32.xlu0 %v311, 125
        %v313 = vpop.permute.xlu0 %312
        %vm315 = vcmask 523270
        %316 = vst.msk [vmem:[#allocation2] sm:$0xc0] %vm315, %v313
        %v317 = vld [vmem:[%s260] sm:$0x3]
        %v320 = vunpack.c.l.s4 1983009808
        %v321 = vunpack.c.0.s8 %v320
        %v322 = vlaneseq
        %v323 = vshrl.u32 %v322, 7
        %v324 = vsub.s32 %v321, %v323
        %v325 = vrot.slane %v317, %v324
        %326 = vrot.lane.b32.xlu0 %v325, 124
        %v327 = vpop.permute.xlu0 %326
        %329 = vst.msk [vmem:[#allocation2 + $0x8] sm:$0x3] %vm269, %v327
        %v330 = vld [vmem:[%s260] sm:$0x3]
        %v332 = vcombine.low %v330, %v330
        %v334 = vunpack.c.l.s4 1983009808
        %v335 = vunpack.c.0.s8 %v334
        %v336 = vlaneseq
        %v337 = vshrl.u32 %v336, 7
        %v338 = vsub.s32 %v335, %v337
        %v339 = vrot.slane %v332, %v338
        %340 = vrot.lane.b32.xlu0 %v339, 123
        %v341 = vpop.permute.xlu0 %340
        %343 = vst.msk [vmem:[#allocation2 + $0x8] sm:$0xc] %vm284, %v341
        %v344 = vld [vmem:[%s260] sm:$0x3]
        %v347 = vunpack.c.l.s4 1983009808
        %v348 = vunpack.c.0.s8 %v347
        %v349 = vlaneseq
        %v350 = vshrl.u32 %v349, 7
        %v351 = vsub.s32 %v348, %v350
        %v352 = vrot.slane %v344, %v351
        %v353 = vcombine.low %v352, %v352
        %354 = vrot.lane.b32.xlu0 %v353, 122
        %v355 = vpop.permute.xlu0 %354
        %357 = vst.msk [vmem:[#allocation2 + $0x8] sm:$0x30] %vm299, %v355
        %v358 = vld [vmem:[%s260] sm:$0x3]
        %v360 = vcombine.low %v358, %v358
        %v362 = vunpack.c.l.s4 1983009808
        %v363 = vunpack.c.0.s8 %v362
        %v364 = vlaneseq
        %v365 = vshrl.u32 %v364, 7
        %v366 = vsub.s32 %v363, %v365
        %v367 = vrot.slane %v360, %v366
        %v368 = vcombine.low %v367, %v367
        %369 = vrot.lane.b32.xlu0 %v368, 121
        %v370 = vpop.permute.xlu0 %369
        %372 = vst.msk [vmem:[#allocation2 + $0x8] sm:$0xc0] %vm315, %v370
        %v373 = vld [vmem:[%s260] sm:$0x3]
        %v376 = vunpack.c.l.s4 1983009808
        %v377 = vunpack.c.0.s8 %v376
        %v378 = vlaneseq
        %v379 = vshrl.u32 %v378, 7
        %v380 = vsub.s32 %v377, %v379
        %v381 = vrot.slane %v373, %v380
        %382 = vrot.lane.b32.xlu0 %v381, 120
        %v383 = vpop.permute.xlu0 %382
        %385 = vst.msk [vmem:[#allocation2 + $0x10] sm:$0x3] %vm269, %v383
        %v386 = vld [vmem:[%s260] sm:$0x3]
        %v388 = vcombine.low %v386, %v386
        %v390 = vunpack.c.l.s4 1983009808
        %v391 = vunpack.c.0.s8 %v390
        %v392 = vlaneseq
        %v393 = vshrl.u32 %v392, 7
        %v394 = vsub.s32 %v391, %v393
        %v395 = vrot.slane %v388, %v394
        %396 = vrot.lane.b32.xlu0 %v395, 119
        %v397 = vpop.permute.xlu0 %396
        %399 = vst.msk [vmem:[#allocation2 + $0x10] sm:$0xc] %vm284, %v397
        %v400 = vld [vmem:[%s260] sm:$0x3]
        %v403 = vunpack.c.l.s4 1983009808
        %v404 = vunpack.c.0.s8 %v403
        %v405 = vlaneseq
        %v406 = vshrl.u32 %v405, 7
        %v407 = vsub.s32 %v404, %v406
        %v408 = vrot.slane %v400, %v407
        %v409 = vcombine.low %v408, %v408
        %410 = vrot.lane.b32.xlu0 %v409, 118
        %v411 = vpop.permute.xlu0 %410
        %413 = vst.msk [vmem:[#allocation2 + $0x10] sm:$0x30] %vm299, %v411
        %v414 = vld [vmem:[%s260] sm:$0x3]
        %v416 = vcombine.low %v414, %v414
        %v418 = vunpack.c.l.s4 1983009808
        %v419 = vunpack.c.0.s8 %v418
        %v420 = vlaneseq
        %v421 = vshrl.u32 %v420, 7
        %v422 = vsub.s32 %v419, %v421
        %v423 = vrot.slane %v416, %v422
        %v424 = vcombine.low %v423, %v423
        %425 = vrot.lane.b32.xlu0 %v424, 117
        %v426 = vpop.permute.xlu0 %425
        %428 = vst.msk [vmem:[#allocation2 + $0x10] sm:$0xc0] %vm315, %v426
        %v429 = vld [vmem:[%s260] sm:$0x3]
        %v432 = vunpack.c.l.s4 1983009808
        %v433 = vunpack.c.0.s8 %v432
        %v434 = vlaneseq
        %v435 = vshrl.u32 %v434, 7
        %v436 = vsub.s32 %v433, %v435
        %v437 = vrot.slane %v429, %v436
        %438 = vrot.lane.b32.xlu0 %v437, 116
        %v439 = vpop.permute.xlu0 %438
        %441 = vst.msk [vmem:[#allocation2 + $0x18] sm:$0x3] %vm269, %v439
        %v442 = vld [vmem:[%s260] sm:$0x3]
        %v444 = vcombine.low %v442, %v442
        %v446 = vunpack.c.l.s4 1983009808
        %v447 = vunpack.c.0.s8 %v446
        %v448 = vlaneseq
        %v449 = vshrl.u32 %v448, 7
        %v450 = vsub.s32 %v447, %v449
        %v451 = vrot.slane %v444, %v450
        %452 = vrot.lane.b32.xlu0 %v451, 115
        %v453 = vpop.permute.xlu0 %452
        %455 = vst.msk [vmem:[#allocation2 + $0x18] sm:$0xc] %vm284, %v453
        %v456 = vld [vmem:[%s260] sm:$0x3]
        %v459 = vunpack.c.l.s4 1983009808
        %v460 = vunpack.c.0.s8 %v459
        %v461 = vlaneseq
        %v462 = vshrl.u32 %v461, 7
        %v463 = vsub.s32 %v460, %v462
        %v464 = vrot.slane %v456, %v463
        %v465 = vcombine.low %v464, %v464
        %466 = vrot.lane.b32.xlu0 %v465, 114
        %v467 = vpop.permute.xlu0 %466
        %469 = vst.msk [vmem:[#allocation2 + $0x18] sm:$0x30] %vm299, %v467
        %v470 = vld [vmem:[%s260] sm:$0x3]
        %v472 = vcombine.low %v470, %v470
        %v474 = vunpack.c.l.s4 1983009808
        %v475 = vunpack.c.0.s8 %v474
        %v476 = vlaneseq
        %v477 = vshrl.u32 %v476, 7
        %v478 = vsub.s32 %v475, %v477
        %v479 = vrot.slane %v472, %v478
        %v480 = vcombine.low %v479, %v479
        %481 = vrot.lane.b32.xlu0 %v480, 113
        %v482 = vpop.permute.xlu0 %481
        %484 = vst.msk [vmem:[#allocation2 + $0x18] sm:$0xc0] %vm315, %v482
        %v485 = vld [vmem:[%s260] sm:$0x3]
        %v488 = vunpack.c.l.s4 1983009808
        %v489 = vunpack.c.0.s8 %v488
        %v490 = vlaneseq
        %v491 = vshrl.u32 %v490, 7
        %v492 = vsub.s32 %v489, %v491
        %v493 = vrot.slane %v485, %v492
        %494 = vrot.lane.b32.xlu0 %v493, 112
        %v495 = vpop.permute.xlu0 %494
        %497 = vst.msk [vmem:[#allocation2 + $0x20] sm:$0x3] %vm269, %v495
        %v498 = vld [vmem:[%s260] sm:$0x3]
        %v500 = vcombine.low %v498, %v498
        %v502 = vunpack.c.l.s4 1983009808
        %v503 = vunpack.c.0.s8 %v502
        %v504 = vlaneseq
        %v505 = vshrl.u32 %v504, 7
        %v506 = vsub.s32 %v503, %v505
        %v507 = vrot.slane %v500, %v506
        %508 = vrot.lane.b32.xlu0 %v507, 111
        %v509 = vpop.permute.xlu0 %508
        %511 = vst.msk [vmem:[#allocation2 + $0x20] sm:$0xc] %vm284, %v509
        %v512 = vld [vmem:[%s260] sm:$0x3]
        %v515 = vunpack.c.l.s4 1983009808
        %v516 = vunpack.c.0.s8 %v515
        %v517 = vlaneseq
        %v518 = vshrl.u32 %v517, 7
        %v519 = vsub.s32 %v516, %v518
        %v520 = vrot.slane %v512, %v519
        %v521 = vcombine.low %v520, %v520
        %522 = vrot.lane.b32.xlu0 %v521, 110
        %v523 = vpop.permute.xlu0 %522
        %525 = vst.msk [vmem:[#allocation2 + $0x20] sm:$0x30] %vm299, %v523
        %v526 = vld [vmem:[%s260] sm:$0x3]
        %v528 = vcombine.low %v526, %v526
        %v530 = vunpack.c.l.s4 1983009808
        %v531 = vunpack.c.0.s8 %v530
        %v532 = vlaneseq
        %v533 = vshrl.u32 %v532, 7
        %v534 = vsub.s32 %v531, %v533
        %v535 = vrot.slane %v528, %v534
        %v536 = vcombine.low %v535, %v535
        %537 = vrot.lane.b32.xlu0 %v536, 109
        %v538 = vpop.permute.xlu0 %537
        %540 = vst.msk [vmem:[#allocation2 + $0x20] sm:$0xc0] %vm315, %v538
        %v541 = vld [vmem:[%s260] sm:$0x3]
        %v544 = vunpack.c.l.s4 1983009808
        %v545 = vunpack.c.0.s8 %v544
        %v546 = vlaneseq
        %v547 = vshrl.u32 %v546, 7
        %v548 = vsub.s32 %v545, %v547
        %v549 = vrot.slane %v541, %v548
        %550 = vrot.lane.b32.xlu0 %v549, 108
        %v551 = vpop.permute.xlu0 %550
        %553 = vst.msk [vmem:[#allocation2 + $0x28] sm:$0x3] %vm269, %v551
        %v554 = vld [vmem:[%s260] sm:$0x3]
        %v556 = vcombine.low %v554, %v554
        %v558 = vunpack.c.l.s4 1983009808
        %v559 = vunpack.c.0.s8 %v558
        %v560 = vlaneseq
        %v561 = vshrl.u32 %v560, 7
        %v562 = vsub.s32 %v559, %v561
        %v563 = vrot.slane %v556, %v562
        %564 = vrot.lane.b32.xlu0 %v563, 107
        %v565 = vpop.permute.xlu0 %564
        %567 = vst.msk [vmem:[#allocation2 + $0x28] sm:$0xc] %vm284, %v565
        %v568 = vld [vmem:[%s260] sm:$0x3]
        %v571 = vunpack.c.l.s4 1983009808
        %v572 = vunpack.c.0.s8 %v571
        %v573 = vlaneseq
        %v574 = vshrl.u32 %v573, 7
        %v575 = vsub.s32 %v572, %v574
        %v576 = vrot.slane %v568, %v575
        %v577 = vcombine.low %v576, %v576
        %578 = vrot.lane.b32.xlu0 %v577, 106
        %v579 = vpop.permute.xlu0 %578
        %581 = vst.msk [vmem:[#allocation2 + $0x28] sm:$0x30] %vm299, %v579
        %v582 = vld [vmem:[%s260] sm:$0x3]
        %v584 = vcombine.low %v582, %v582
        %v586 = vunpack.c.l.s4 1983009808
        %v587 = vunpack.c.0.s8 %v586
        %v588 = vlaneseq
        %v589 = vshrl.u32 %v588, 7
        %v590 = vsub.s32 %v587, %v589
        %v591 = vrot.slane %v584, %v590
        %v592 = vcombine.low %v591, %v591
        %593 = vrot.lane.b32.xlu0 %v592, 105
        %v594 = vpop.permute.xlu0 %593
        %596 = vst.msk [vmem:[#allocation2 + $0x28] sm:$0xc0] %vm315, %v594
        %v597 = vld [vmem:[%s260] sm:$0x3]
        %v600 = vunpack.c.l.s4 1983009808
        %v601 = vunpack.c.0.s8 %v600
        %v602 = vlaneseq
        %v603 = vshrl.u32 %v602, 7
        %v604 = vsub.s32 %v601, %v603
        %v605 = vrot.slane %v597, %v604
        %606 = vrot.lane.b32.xlu0 %v605, 104
        %v607 = vpop.permute.xlu0 %606
        %609 = vst.msk [vmem:[#allocation2 + $0x30] sm:$0x3] %vm269, %v607
        %v610 = vld [vmem:[%s260] sm:$0x3]
        %v612 = vcombine.low %v610, %v610
        %v614 = vunpack.c.l.s4 1983009808
        %v615 = vunpack.c.0.s8 %v614
        %v616 = vlaneseq
        %v617 = vshrl.u32 %v616, 7
        %v618 = vsub.s32 %v615, %v617
        %v619 = vrot.slane %v612, %v618
        %620 = vrot.lane.b32.xlu0 %v619, 103
        %v621 = vpop.permute.xlu0 %620
        %623 = vst.msk [vmem:[#allocation2 + $0x30] sm:$0xc] %vm284, %v621
        %v624 = vld [vmem:[%s260] sm:$0x3]
        %v627 = vunpack.c.l.s4 1983009808
        %v628 = vunpack.c.0.s8 %v627
        %v629 = vlaneseq
        %v630 = vshrl.u32 %v629, 7
        %v631 = vsub.s32 %v628, %v630
        %v632 = vrot.slane %v624, %v631
        %v633 = vcombine.low %v632, %v632
        %634 = vrot.lane.b32.xlu0 %v633, 102
        %v635 = vpop.permute.xlu0 %634
        %637 = vst.msk [vmem:[#allocation2 + $0x30] sm:$0x30] %vm299, %v635
        %v638 = vld [vmem:[%s260] sm:$0x3]
        %v640 = vcombine.low %v638, %v638
        %v642 = vunpack.c.l.s4 1983009808
        %v643 = vunpack.c.0.s8 %v642
        %v644 = vlaneseq
        %v645 = vshrl.u32 %v644, 7
        %v646 = vsub.s32 %v643, %v645
        %v647 = vrot.slane %v640, %v646
        %v648 = vcombine.low %v647, %v647
        %649 = vrot.lane.b32.xlu0 %v648, 101
        %v650 = vpop.permute.xlu0 %649
        %652 = vst.msk [vmem:[#allocation2 + $0x30] sm:$0xc0] %vm315, %v650
        %v653 = vld [vmem:[%s260] sm:$0x3]
        %v656 = vunpack.c.l.s4 1983009808
        %v657 = vunpack.c.0.s8 %v656
        %v658 = vlaneseq
        %v659 = vshrl.u32 %v658, 7
        %v660 = vsub.s32 %v657, %v659
        %v661 = vrot.slane %v653, %v660
        %662 = vrot.lane.b32.xlu0 %v661, 100
        %v663 = vpop.permute.xlu0 %662
        %665 = vst.msk [vmem:[#allocation2 + $0x38] sm:$0x3] %vm269, %v663
        %v666 = vld [vmem:[%s260] sm:$0x3]
        %v668 = vcombine.low %v666, %v666
        %v670 = vunpack.c.l.s4 1983009808
        %v671 = vunpack.c.0.s8 %v670
        %v672 = vlaneseq
        %v673 = vshrl.u32 %v672, 7
        %v674 = vsub.s32 %v671, %v673
        %v675 = vrot.slane %v668, %v674
        %676 = vrot.lane.b32.xlu0 %v675, 99
        %v677 = vpop.permute.xlu0 %676
        %679 = vst.msk [vmem:[#allocation2 + $0x38] sm:$0xc] %vm284, %v677
        %v680 = vld [vmem:[%s260] sm:$0x3]
        %v683 = vunpack.c.l.s4 1983009808
        %v684 = vunpack.c.0.s8 %v683
        %v685 = vlaneseq
        %v686 = vshrl.u32 %v685, 7
        %v687 = vsub.s32 %v684, %v686
        %v688 = vrot.slane %v680, %v687
        %v689 = vcombine.low %v688, %v688
        %690 = vrot.lane.b32.xlu0 %v689, 98
        %v691 = vpop.permute.xlu0 %690
        %693 = vst.msk [vmem:[#allocation2 + $0x38] sm:$0x30] %vm299, %v691
        %v694 = vld [vmem:[%s260] sm:$0x3]
        %v696 = vcombine.low %v694, %v694
        %v698 = vunpack.c.l.s4 1983009808
        %v699 = vunpack.c.0.s8 %v698
        %v700 = vlaneseq
        %v701 = vshrl.u32 %v700, 7
        %v702 = vsub.s32 %v699, %v701
        %v703 = vrot.slane %v696, %v702
        %v704 = vcombine.low %v703, %v703
        %705 = vrot.lane.b32.xlu0 %v704, 97
        %v706 = vpop.permute.xlu0 %705
        %708 = vst.msk [vmem:[#allocation2 + $0x38] sm:$0xc0] %vm315, %v706
        %v709 = vld [vmem:[%s260] sm:$0x3]
        %v712 = vunpack.c.l.s4 1983009808
        %v713 = vunpack.c.0.s8 %v712
        %v714 = vlaneseq
        %v715 = vshrl.u32 %v714, 7
        %v716 = vsub.s32 %v713, %v715
        %v717 = vrot.slane %v709, %v716
        %718 = vrot.lane.b32.xlu0 %v717, 96
        %v719 = vpop.permute.xlu0 %718
        %721 = vst.msk [vmem:[#allocation2 + $0x40] sm:$0x3] %vm269, %v719
        %v722 = vld [vmem:[%s260] sm:$0x3]
        %v724 = vcombine.low %v722, %v722
        %v726 = vunpack.c.l.s4 1983009808
        %v727 = vunpack.c.0.s8 %v726
        %v728 = vlaneseq
        %v729 = vshrl.u32 %v728, 7
        %v730 = vsub.s32 %v727, %v729
        %v731 = vrot.slane %v724, %v730
        %732 = vrot.lane.b32.xlu0 %v731, 95
        %v733 = vpop.permute.xlu0 %732
        %735 = vst.msk [vmem:[#allocation2 + $0x40] sm:$0xc] %vm284, %v733
        %v736 = vld [vmem:[%s260] sm:$0x3]
        %v739 = vunpack.c.l.s4 1983009808
        %v740 = vunpack.c.0.s8 %v739
        %v741 = vlaneseq
        %v742 = vshrl.u32 %v741, 7
        %v743 = vsub.s32 %v740, %v742
        %v744 = vrot.slane %v736, %v743
        %v745 = vcombine.low %v744, %v744
        %746 = vrot.lane.b32.xlu0 %v745, 94
        %v747 = vpop.permute.xlu0 %746
        %749 = vst.msk [vmem:[#allocation2 + $0x40] sm:$0x30] %vm299, %v747
        %v750 = vld [vmem:[%s260] sm:$0x3]
        %v752 = vcombine.low %v750, %v750
        %v754 = vunpack.c.l.s4 1983009808
        %v755 = vunpack.c.0.s8 %v754
        %v756 = vlaneseq
        %v757 = vshrl.u32 %v756, 7
        %v758 = vsub.s32 %v755, %v757
        %v759 = vrot.slane %v752, %v758
        %v760 = vcombine.low %v759, %v759
        %761 = vrot.lane.b32.xlu0 %v760, 93
        %v762 = vpop.permute.xlu0 %761
        %764 = vst.msk [vmem:[#allocation2 + $0x40] sm:$0xc0] %vm315, %v762
        %v765 = vld [vmem:[%s260] sm:$0x3]
        %v768 = vunpack.c.l.s4 1983009808
        %v769 = vunpack.c.0.s8 %v768
        %v770 = vlaneseq
        %v771 = vshrl.u32 %v770, 7
        %v772 = vsub.s32 %v769, %v771
        %v773 = vrot.slane %v765, %v772
        %774 = vrot.lane.b32.xlu0 %v773, 92
        %v775 = vpop.permute.xlu0 %774
        %777 = vst.msk [vmem:[#allocation2 + $0x48] sm:$0x3] %vm269, %v775
        %v778 = vld [vmem:[%s260] sm:$0x3]
        %v780 = vcombine.low %v778, %v778
        %v782 = vunpack.c.l.s4 1983009808
        %v783 = vunpack.c.0.s8 %v782
        %v784 = vlaneseq
        %v785 = vshrl.u32 %v784, 7
        %v786 = vsub.s32 %v783, %v785
        %v787 = vrot.slane %v780, %v786
        %788 = vrot.lane.b32.xlu0 %v787, 91
        %v789 = vpop.permute.xlu0 %788
        %791 = vst.msk [vmem:[#allocation2 + $0x48] sm:$0xc] %vm284, %v789
        %v792 = vld [vmem:[%s260] sm:$0x3]
        %v795 = vunpack.c.l.s4 1983009808
        %v796 = vunpack.c.0.s8 %v795
        %v797 = vlaneseq
        %v798 = vshrl.u32 %v797, 7
        %v799 = vsub.s32 %v796, %v798
        %v800 = vrot.slane %v792, %v799
        %v801 = vcombine.low %v800, %v800
        %802 = vrot.lane.b32.xlu0 %v801, 90
        %v803 = vpop.permute.xlu0 %802
        %805 = vst.msk [vmem:[#allocation2 + $0x48] sm:$0x30] %vm299, %v803
        %v806 = vld [vmem:[%s260] sm:$0x3]
        %v808 = vcombine.low %v806, %v806
        %v810 = vunpack.c.l.s4 1983009808
        %v811 = vunpack.c.0.s8 %v810
        %v812 = vlaneseq
        %v813 = vshrl.u32 %v812, 7
        %v814 = vsub.s32 %v811, %v813
        %v815 = vrot.slane %v808, %v814
        %v816 = vcombine.low %v815, %v815
        %817 = vrot.lane.b32.xlu0 %v816, 89
        %v818 = vpop.permute.xlu0 %817
        %820 = vst.msk [vmem:[#allocation2 + $0x48] sm:$0xc0] %vm315, %v818
        %v821 = vld [vmem:[%s260] sm:$0x3]
        %v824 = vunpack.c.l.s4 1983009808
        %v825 = vunpack.c.0.s8 %v824
        %v826 = vlaneseq
        %v827 = vshrl.u32 %v826, 7
        %v828 = vsub.s32 %v825, %v827
        %v829 = vrot.slane %v821, %v828
        %830 = vrot.lane.b32.xlu0 %v829, 88
        %v831 = vpop.permute.xlu0 %830
        %833 = vst.msk [vmem:[#allocation2 + $0x50] sm:$0x3] %vm269, %v831
        %v834 = vld [vmem:[%s260] sm:$0x3]
        %v836 = vcombine.low %v834, %v834
        %v838 = vunpack.c.l.s4 1983009808
        %v839 = vunpack.c.0.s8 %v838
        %v840 = vlaneseq
        %v841 = vshrl.u32 %v840, 7
        %v842 = vsub.s32 %v839, %v841
        %v843 = vrot.slane %v836, %v842
        %844 = vrot.lane.b32.xlu0 %v843, 87
        %v845 = vpop.permute.xlu0 %844
        %847 = vst.msk [vmem:[#allocation2 + $0x50] sm:$0xc] %vm284, %v845
        %v848 = vld [vmem:[%s260] sm:$0x3]
        %v851 = vunpack.c.l.s4 1983009808
        %v852 = vunpack.c.0.s8 %v851
        %v853 = vlaneseq
        %v854 = vshrl.u32 %v853, 7
        %v855 = vsub.s32 %v852, %v854
        %v856 = vrot.slane %v848, %v855
        %v857 = vcombine.low %v856, %v856
        %858 = vrot.lane.b32.xlu0 %v857, 86
        %v859 = vpop.permute.xlu0 %858
        %861 = vst.msk [vmem:[#allocation2 + $0x50] sm:$0x30] %vm299, %v859
        %v862 = vld [vmem:[%s260] sm:$0x3]
        %v864 = vcombine.low %v862, %v862
        %v866 = vunpack.c.l.s4 1983009808
        %v867 = vunpack.c.0.s8 %v866
        %v868 = vlaneseq
        %v869 = vshrl.u32 %v868, 7
        %v870 = vsub.s32 %v867, %v869
        %v871 = vrot.slane %v864, %v870
        %v872 = vcombine.low %v871, %v871
        %873 = vrot.lane.b32.xlu0 %v872, 85
        %v874 = vpop.permute.xlu0 %873
        %876 = vst.msk [vmem:[#allocation2 + $0x50] sm:$0xc0] %vm315, %v874
        %v877 = vld [vmem:[%s260] sm:$0x3]
        %v880 = vunpack.c.l.s4 1983009808
        %v881 = vunpack.c.0.s8 %v880
        %v882 = vlaneseq
        %v883 = vshrl.u32 %v882, 7
        %v884 = vsub.s32 %v881, %v883
        %v885 = vrot.slane %v877, %v884
        %886 = vrot.lane.b32.xlu0 %v885, 84
        %v887 = vpop.permute.xlu0 %886
        %889 = vst.msk [vmem:[#allocation2 + $0x58] sm:$0x3] %vm269, %v887
        %v890 = vld [vmem:[%s260] sm:$0x3]
        %v892 = vcombine.low %v890, %v890
        %v894 = vunpack.c.l.s4 1983009808
        %v895 = vunpack.c.0.s8 %v894
        %v896 = vlaneseq
        %v897 = vshrl.u32 %v896, 7
        %v898 = vsub.s32 %v895, %v897
        %v899 = vrot.slane %v892, %v898
        %900 = vrot.lane.b32.xlu0 %v899, 83
        %v901 = vpop.permute.xlu0 %900
        %903 = vst.msk [vmem:[#allocation2 + $0x58] sm:$0xc] %vm284, %v901
        %v904 = vld [vmem:[%s260] sm:$0x3]
        %v907 = vunpack.c.l.s4 1983009808
        %v908 = vunpack.c.0.s8 %v907
        %v909 = vlaneseq
        %v910 = vshrl.u32 %v909, 7
        %v911 = vsub.s32 %v908, %v910
        %v912 = vrot.slane %v904, %v911
        %v913 = vcombine.low %v912, %v912
        %914 = vrot.lane.b32.xlu0 %v913, 82
        %v915 = vpop.permute.xlu0 %914
        %917 = vst.msk [vmem:[#allocation2 + $0x58] sm:$0x30] %vm299, %v915
        %v918 = vld [vmem:[%s260] sm:$0x3]
        %v920 = vcombine.low %v918, %v918
        %v922 = vunpack.c.l.s4 1983009808
        %v923 = vunpack.c.0.s8 %v922
        %v924 = vlaneseq
        %v925 = vshrl.u32 %v924, 7
        %v926 = vsub.s32 %v923, %v925
        %v927 = vrot.slane %v920, %v926
        %v928 = vcombine.low %v927, %v927
        %929 = vrot.lane.b32.xlu0 %v928, 81
        %v930 = vpop.permute.xlu0 %929
        %932 = vst.msk [vmem:[#allocation2 + $0x58] sm:$0xc0] %vm315, %v930
        %v933 = vld [vmem:[%s260] sm:$0x3]
        %v936 = vunpack.c.l.s4 1983009808
        %v937 = vunpack.c.0.s8 %v936
        %v938 = vlaneseq
        %v939 = vshrl.u32 %v938, 7
        %v940 = vsub.s32 %v937, %v939
        %v941 = vrot.slane %v933, %v940
        %942 = vrot.lane.b32.xlu0 %v941, 80
        %v943 = vpop.permute.xlu0 %942
        %945 = vst.msk [vmem:[#allocation2 + $0x60] sm:$0x3] %vm269, %v943
        %v946 = vld [vmem:[%s260] sm:$0x3]
        %v948 = vcombine.low %v946, %v946
        %v950 = vunpack.c.l.s4 1983009808
        %v951 = vunpack.c.0.s8 %v950
        %v952 = vlaneseq
        %v953 = vshrl.u32 %v952, 7
        %v954 = vsub.s32 %v951, %v953
        %v955 = vrot.slane %v948, %v954
        %956 = vrot.lane.b32.xlu0 %v955, 79
        %v957 = vpop.permute.xlu0 %956
        %959 = vst.msk [vmem:[#allocation2 + $0x60] sm:$0xc] %vm284, %v957
        %v960 = vld [vmem:[%s260] sm:$0x3]
        %v963 = vunpack.c.l.s4 1983009808
        %v964 = vunpack.c.0.s8 %v963
        %v965 = vlaneseq
        %v966 = vshrl.u32 %v965, 7
        %v967 = vsub.s32 %v964, %v966
        %v968 = vrot.slane %v960, %v967
        %v969 = vcombine.low %v968, %v968
        %970 = vrot.lane.b32.xlu0 %v969, 78
        %v971 = vpop.permute.xlu0 %970
        %973 = vst.msk [vmem:[#allocation2 + $0x60] sm:$0x30] %vm299, %v971
        %v974 = vlaneseq
        %v975 = vshrl.u32 %v974, 7
        %vm976 = vcmp.eq.s32.totalorder %v975, 0
        %v977 = vsel %vm976, 1.0, 0.0
        %v978 = vpack.c.bf16 %v977, %v977
        %v980 = vrot.slane %v978, 2
        %982 = vst.msk [vmem:[#allocation2 + $0x60] sm:$0xc0] %vm315, %v980
        %v983 = vld [vmem:[#allocation3] sm:$0xff]
        %v984 = vld [vmem:[#allocation3 + $0x8] sm:$0xff]
        %v985 = vld [vmem:[#allocation3 + $0x10] sm:$0x33]
        %v986 = vld [vmem:[#allocation2] sm:$0xff]
        %v987 = vld [vmem:[#allocation2 + $0x8] sm:$0xff]
        %v988 = vld [vmem:[#allocation2 + $0x10] sm:$0xff]
        %v989 = vld [vmem:[#allocation2 + $0x18] sm:$0xff]
        %v990 = vld [vmem:[#allocation2 + $0x20] sm:$0xff]
        %v991 = vld [vmem:[#allocation2 + $0x28] sm:$0xff]
        %v992 = vld [vmem:[#allocation2 + $0x30] sm:$0xff]
        %v993 = vld [vmem:[#allocation2 + $0x38] sm:$0xff]
        %v994 = vld [vmem:[#allocation2 + $0x40] sm:$0xff]
        %v995 = vld [vmem:[#allocation2 + $0x48] sm:$0xff]
        %v996 = vld [vmem:[#allocation2 + $0x50] sm:$0xff]
        %v997 = vld [vmem:[#allocation2 + $0x58] sm:$0xff]
        %v998 = vld [vmem:[#allocation2 + $0x60] sm:$0xff]
        %v1002 = vunpack.c.l.b16 %v983
        %v1003 = vunpack.c.h.b16 %v983
        %v1004 = vunpack.c.l.b16 %v984
        %v1005 = vunpack.c.h.b16 %v984
        %v1006 = vunpack.c.l.b16 %v985
        %v1007 = vunpack.c.h.b16 %v985
        %v1008 = vpack.c.b16 %v1004, %v1002
        %v1009 = vpack.c.b16 %v1005, %v1003
        %v1010 = vpack.c.b16 %v1006, %v1006
        %v1011 = vpack.c.b16 %v1007, %v1007
        %vm1014 = vcmask 654336
        %v1016 = vsel %vm1014, %v1009, 0
        %v1019 = vsel %vm1014, %v1011, 0
        %1021 = vmatprep.subr.bf16.mxu0 0
        %1022 = vmatpush1.bf16.msra.mxu0 %v986
        %1023 = vmatprep.subr.bf16.mxu0 0
        %1024 = vmatpush1.bf16.msra.mxu0 %v987
        %1025 = vmatprep.subr.bf16.mxu0 0
        %1026 = vmatpush1.bf16.msra.mxu0 %v988
        %1027 = vmatprep.subr.bf16.mxu0 0
        %1028 = vmatpush1.bf16.msra.mxu0 %v989
        %1029 = vmatprep.subr.bf16.mxu0 0
        %1030 = vmatpush1.bf16.msra.mxu0 %v990
        %1031 = vmatprep.subr.bf16.mxu0 0
        %1032 = vmatpush1.bf16.msra.mxu0 %v991
        %1033 = vmatprep.subr.bf16.mxu0 0
        %1034 = vmatpush1.bf16.msra.mxu0 %v992
        %1035 = vmatprep.subr.bf16.mxu0 0
        %1036 = vmatpush1.bf16.msra.mxu0 %v993
        %1037 = vmatprep.subr.bf16.mxu0 0
        %1038 = vmatpush1.bf16.msra.mxu0 %v994
        %1039 = vmatprep.subr.bf16.mxu0 0
        %1040 = vmatpush1.bf16.msra.mxu0 %v995
        %1041 = vmatprep.subr.bf16.mxu0 0
        %1042 = vmatpush1.bf16.msra.mxu0 %v996
        %1043 = vmatprep.subr.bf16.mxu0 0
        %1044 = vmatpush1.bf16.msra.mxu0 %v997
        %1045 = vmatprep.subr.bf16.mxu0 0
        %1046 = vmatpush1.bf16.msra.mxu0 %v998
        %1047 = vmatprep.subr.bf16.mxu0 0
        %1048 = vmatpush1.bf16.msra.mxu0 0
        %1049 = vmatprep.subr.bf16.mxu0 0
        %1050 = vmatpush1.bf16.msra.mxu0 0
        %1051 = vmatprep.subr.bf16.mxu0 0
        %1052 = vmatpush1.bf16.msra.mxu0 0
        %1053 = vmatprep.mubr.bf16.mxu0 %v1016
        %1054 = vmatmul.mubr.bf16.gmra.mrb[0].mxu0 %v1008
        %v1055 = vpop.f32.mrb[0].mxu0
        %v1056 = vadd.f32 0.0, %v1055
        %v1057 = vpop.f32.mrb[0].mxu0
        %v1058 = vpop.f32.mrb[0].mxu0
        %v1059 = vadd.f32 0.0, %v1058
        %v1060 = vpop.f32.mrb[0].mxu0
        %1061 = vmatprep.mubr.bf16.mxu0 %v1019
        %1062 = vmatmul.mubr.bf16.gmra.mrb[0].mxu0 %v1010
        %v1063 = vpop.f32.mrb[0].mxu0
        %v1064 = vadd.f32 0.0, %v1063
        %v1065 = vpop.f32.mrb[0].mxu0
        %v1066 = vpop.f32.mrb[0].mxu0
        %v1067 = vpop.f32.mrb[0].mxu0
        %1068 = vdwg.mxu0
        %v1069 = vxor.u32 %v1056, 2147483648
        %v1070 = vxor.u32 %v1059, 2147483648
        %v1071 = vxor.u32 %v1064, 2147483648
        %v1072 = vmul.f32 %v1069, 1.442695
        %v1073 = vpow.pop %v1072
        %v1074 = vmul.f32 %v1070, 1.442695
        %v1075 = vpow.pop %v1074
        %v1076 = vmul.f32 %v1071, 1.442695
        %v1077 = vpow.pop %v1076
        %v1078 = vadd.f32 %v1073, 1.0
        %v1079 = vadd.f32 %v1075, 1.0
        %v1080 = vadd.f32 %v1077, 1.0
        %v1081 = vrcp.pop %v1078
        %v1082 = vmul.f32 1.0, %v1081
        %v1083 = vrcp.pop %v1079
        %v1084 = vmul.f32 1.0, %v1083
        %v1085 = vrcp.pop %v1080
        %v1086 = vmul.f32 1.0, %v1085
        %vm1087 = vcmask 523264
        %v1088 = vsel %vm1087, %v1082, 0.0
        %1089 = vadd.xlane.f32.xlu0 %v1088
        %v1090 = vpop.xlane.xlu0 %1089
        %v1091 = vsel %vm1087, %v1084, 0.0
        %1092 = vadd.xlane.f32.xlu0 %v1091
        %v1093 = vpop.xlane.xlu0 %1092
        %vm1094 = vcmask 519168
        %v1095 = vsel %vm1094, %v1086, 0.0
        %1096 = vadd.xlane.f32.xlu0 %v1095
        %v1097 = vpop.xlane.xlu0 %1096
        %v1098 = vrcp.pop 64.0
        %v1099 = vmul.f32 %v1090, %v1098
        %v1100 = vmul.f32 %v1093, %v1098
        %v1101 = vmul.f32 %v1097, %v1098
        %v1102 = vld [vmem:[#allocation5] sm:$0xff]
        %v1103 = vld [vmem:[#allocation5 + $0x8] sm:$0xff]
        %v1104 = vld [vmem:[#allocation5 + $0x10] sm:$0xf]
        %v1105 = vmul.f32 %v1102, %v1099
        %v1106 = vmul.f32 %v1103, %v1100
        %v1107 = vmul.f32 %v1104, %v1101
        %vm1108 = vcmask 162816
        %v1109 = vsel %vm1108, %v1105, 0.0
        %v1110 = vsel %vm1108, %v1106, 0.0
        %v1111 = vadd.f32 %v1109, %v1110
        %vm1112 = vcmask 158720
        %v1113 = vsel %vm1112, %v1107, 0.0
        %v1114 = vadd.f32 %v1111, %v1113
        %v1115 = vrot.slane %v1114, 4
        %v1116 = vadd.f32 %v1114, %v1115
        %v1117 = vrot.slane %v1116, 2
        %v1118 = vadd.f32 %v1116, %v1117
        %v1119 = vrot.slane %v1118, 1
        %v1120 = vadd.f32 %v1118, %v1119
        %v1121 = vlaneseq
        %v1122 = vand.u32 %v1121, 127
        %vm1123 = vcmp.lt.s32.totalorder %v1122, 12
        %v1124 = vxor.u32 %v1120, 2147483648
        %v1125 = vmul.f32 %v1124, 1.442695
        %v1126 = vpow.pop %v1125
        %v1127 = vadd.f32 %v1126, 1.0
        %v1128 = vrcp.pop %v1127
        %v1129 = vmul.f32 1.0, %v1128
        %v1130 = vsel %vm1123, %v1129, 1.0
        %v1131 = vld [vmem:[#allocation7] sm:$0xff]
        %v1132 = vld [vmem:[#allocation7 + $0x8] sm:$0xff]
        %v1133 = vld [vmem:[#allocation7 + $0x10] sm:$0xf]
        %v1134 = vmul.f32 %v1131, %v1130
        %v1135 = vmul.f32 %v1132, %v1130
        %v1136 = vmul.f32 %v1133, %v1130
        %v1137 = vpack.c.bf16 %v1135, %v1134
        %v1138 = vpack.c.bf16 %v1136, %v1136
        %v1139 = vpack.c.bf16 %v1084, %v1082
        %v1140 = vpack.c.bf16 %v1086, %v1086
        %v1141 = vld [vmem:[%s4] sm:$0xff]
        %v1142 = vld [vmem:[%s4 + $0x8] sm:$0xff]
        %v1143 = vld [vmem:[%s4 + $0x10] sm:$0xf]
        %1145 = vset.pattern.permute.xlu0 0
        %1146 = vperm.xlu0 %1145, %v1141
        %v1147 = vpop.permute.xlu0 %1146
        %1150 = vset.pattern.permute.xlu0 0
        %1151 = vperm.xlu0 %1150, %v1142
        %v1152 = vpop.permute.xlu0 %1151
        %1155 = vset.pattern.permute.xlu0 0
        %1156 = vperm.xlu0 %1155, %v1143
        %v1157 = vpop.permute.xlu0 %1156
        %v1160 = vsel %vm1108, %v1137, 0
        %v1163 = vsel %vm1108, %v1138, 0
        %vm1165 = vcmask 1041408
        %v1167 = vsel %vm1165, %v1140, 0
        %1169 = vmatprep.subr.bf16.mxu0 0
        %1170 = vmatpush1.bf16.msra.mxu0 %v1139
        %1171 = vmatprep.subr.bf16.mxu0 0
        %1172 = vmatpush1.bf16.msra.mxu0 %v1167
        %1173 = vmatprep.subr.bf16.mxu0 0
        %1174 = vmatpush1.bf16.msra.mxu0 0
        %1175 = vmatprep.subr.bf16.mxu0 0
        %1176 = vmatpush1.bf16.msra.mxu0 0
        %1177 = vmatprep.subr.bf16.mxu0 0
        %1178 = vmatpush1.bf16.msra.mxu0 0
        %1179 = vmatprep.subr.bf16.mxu0 0
        %1180 = vmatpush1.bf16.msra.mxu0 0
        %1181 = vmatprep.subr.bf16.mxu0 0
        %1182 = vmatpush1.bf16.msra.mxu0 0
        %1183 = vmatprep.subr.bf16.mxu0 0
        %1184 = vmatpush1.bf16.msra.mxu0 0
        %1185 = vmatprep.subr.bf16.mxu0 0
        %1186 = vmatpush1.bf16.msra.mxu0 0
        %1187 = vmatprep.subr.bf16.mxu0 0
        %1188 = vmatpush1.bf16.msra.mxu0 0
        %1189 = vmatprep.subr.bf16.mxu0 0
        %1190 = vmatpush1.bf16.msra.mxu0 0
        %1191 = vmatprep.subr.bf16.mxu0 0
        %1192 = vmatpush1.bf16.msra.mxu0 0
        %1193 = vmatprep.subr.bf16.mxu0 0
        %1194 = vmatpush1.bf16.msra.mxu0 0
        %1195 = vmatprep.subr.bf16.mxu0 0
        %1196 = vmatpush1.bf16.msra.mxu0 0
        %1197 = vmatprep.subr.bf16.mxu0 0
        %1198 = vmatpush1.bf16.msra.mxu0 0
        %1199 = vmatprep.subr.bf16.mxu0 0
        %1200 = vmatpush1.bf16.msra.mxu0 0
        %1201 = vmatprep.mubr.bf16.mxu0 0
        %1202 = vmatmul.mubr.bf16.gmra.mrb[0].mxu0 %v1160
        %v1203 = vpop.f32.mrb[0].mxu0
        %v1204 = vadd.f32 %v1147, %v1203
        %v1205 = vpop.f32.mrb[0].mxu0
        %v1206 = vpop.f32.mrb[0].mxu0
        %v1207 = vadd.f32 %v1152, %v1206
        %v1208 = vpop.f32.mrb[0].mxu0
        %1209 = vmatprep.mubr.bf16.mxu0 0
        %1210 = vmatmul.mubr.bf16.gmra.mrb[0].mxu0 %v1163
        %v1211 = vpop.f32.mrb[0].mxu0
        %v1212 = vadd.f32 %v1157, %v1211
        %v1213 = vpop.f32.mrb[0].mxu0
        %v1214 = vpop.f32.mrb[0].mxu0
        %v1215 = vpop.f32.mrb[0].mxu0
        %1216 = vdwg.mxu0
        %v1217 = vpack.c.bf16 %v1207, %v1204
        %v1218 = vpack.c.bf16 %v1212, %v1212
        %v1219 = vxor.u32 %v1217, 2147516416
        %v1220 = vxor.u32 %v1218, 2147516416
        %v1222 = vmul.bf16 %v1219, 1069105081
        %v1223 = vpow.bf16.pop %v1222
        %v1225 = vmul.bf16 %v1220, 1069105081
        %v1226 = vpow.bf16.pop %v1225
        %v1227 = vadd.bf16 %v1223, 1065369472
        %v1228 = vadd.bf16 %v1226, 1065369472
        %v1229 = vrcp.bf16.pop %v1227
        %v1230 = vmul.bf16 1065369472, %v1229
        %v1231 = vrcp.bf16.pop %v1228
        %v1232 = vmul.bf16 1065369472, %v1231
        %v1233 = vunpack.c.l.bf16 %v1230
        %v1234 = vunpack.c.h.bf16 %v1230
        %v1235 = vunpack.c.l.bf16 %v1232
        %v1236 = vmul.f32 %v1204, %v1233
        %v1237 = vmul.f32 %v1207, %v1234
        %v1238 = vmul.f32 %v1212, %v1235
        %1239 = vset.pattern.permute.xlu0 1
        %1240 = vperm.xlu0 %1239, %v1141
        %v1241 = vpop.permute.xlu0 %1240
        %1243 = vset.pattern.permute.xlu0 1
        %1244 = vperm.xlu0 %1243, %v1142
        %v1245 = vpop.permute.xlu0 %1244
        %1247 = vset.pattern.permute.xlu0 1
        %1248 = vperm.xlu0 %1247, %v1143
        %v1249 = vpop.permute.xlu0 %1248
        %v1251 = vmul.f32 %v1236, %v1241
        %v1252 = vmul.f32 %v1237, %v1245
        %v1253 = vmul.f32 %v1238, %v1249
        %1254 = vset.pattern.permute.xlu0 2
        %1255 = vperm.xlu0 %1254, %v1141
        %v1256 = vpop.permute.xlu0 %1255
        %1258 = vset.pattern.permute.xlu0 2
        %1259 = vperm.xlu0 %1258, %v1142
        %v1260 = vpop.permute.xlu0 %1259
        %1262 = vset.pattern.permute.xlu0 2
        %1263 = vperm.xlu0 %1262, %v1143
        %v1264 = vpop.permute.xlu0 %1263
        %v1266 = vadd.f32 %v1251, %v1256
        %v1267 = vadd.f32 %v1252, %v1260
        %v1268 = vadd.f32 %v1253, %v1264
        %1269 = vset.pattern.permute.xlu0 3
        %1270 = vperm.xlu0 %1269, %v1141
        %v1271 = vpop.permute.xlu0 %1270
        %1273 = vset.pattern.permute.xlu0 3
        %1274 = vperm.xlu0 %1273, %v1142
        %v1275 = vpop.permute.xlu0 %1274
        %1277 = vset.pattern.permute.xlu0 3
        %1278 = vperm.xlu0 %1277, %v1143
        %v1279 = vpop.permute.xlu0 %1278
        %v1281 = vmul.f32 %v1236, %v1271
        %v1282 = vmul.f32 %v1237, %v1275
        %v1283 = vmul.f32 %v1238, %v1279
        %1284 = vset.pattern.permute.xlu0 4
        %1285 = vperm.xlu0 %1284, %v1141
        %v1286 = vpop.permute.xlu0 %1285
        %1288 = vset.pattern.permute.xlu0 4
        %1289 = vperm.xlu0 %1288, %v1142
        %v1290 = vpop.permute.xlu0 %1289
        %1292 = vset.pattern.permute.xlu0 4
        %1293 = vperm.xlu0 %1292, %v1143
        %v1294 = vpop.permute.xlu0 %1293
        %v1296 = vadd.f32 %v1281, %v1286
        %v1297 = vadd.f32 %v1282, %v1290
        %v1298 = vadd.f32 %v1283, %v1294
        %v1299 = vpack.c.bf16 %v1267, %v1266
        %v1300 = vpack.c.bf16 %v1268, %v1268
        %v1301 = vxor.u32 %v1299, 2147516416
        %v1302 = vxor.u32 %v1300, 2147516416
        %v1304 = vmul.bf16 %v1301, 1069105081
        %v1305 = vpow.bf16.pop %v1304
        %v1307 = vmul.bf16 %v1302, 1069105081
        %v1308 = vpow.bf16.pop %v1307
        %v1309 = vadd.bf16 %v1305, 1065369472
        %v1310 = vadd.bf16 %v1308, 1065369472
        %v1311 = vrcp.bf16.pop %v1309
        %v1312 = vmul.bf16 1065369472, %v1311
        %v1313 = vrcp.bf16.pop %v1310
        %v1314 = vmul.bf16 1065369472, %v1313
        %v1315 = vunpack.c.l.bf16 %v1312
        %v1316 = vunpack.c.h.bf16 %v1312
        %v1317 = vunpack.c.l.bf16 %v1314
        %v1318 = vmul.f32 %v1266, %v1315
        %v1319 = vmul.f32 %v1267, %v1316
        %v1320 = vmul.f32 %v1268, %v1317
        %v1321 = vpack.c.bf16 %v1297, %v1296
        %v1322 = vpack.c.bf16 %v1298, %v1298
        %v1323 = vxor.u32 %v1321, 2147516416
        %v1324 = vxor.u32 %v1322, 2147516416
        %v1326 = vmul.bf16 %v1323, 1069105081
        %v1327 = vpow.bf16.pop %v1326
        %v1329 = vmul.bf16 %v1324, 1069105081
        %v1330 = vpow.bf16.pop %v1329
        %v1331 = vadd.bf16 %v1327, 1065369472
        %v1332 = vadd.bf16 %v1330, 1065369472
        %v1333 = vrcp.bf16.pop %v1331
        %v1334 = vmul.bf16 1065369472, %v1333
        %v1335 = vrcp.bf16.pop %v1332
        %v1336 = vmul.bf16 1065369472, %v1335
        %v1337 = vunpack.c.l.bf16 %v1334
        %v1338 = vunpack.c.h.bf16 %v1334
        %v1339 = vunpack.c.l.bf16 %v1336
        %v1340 = vmul.f32 %v1296, %v1337
        %v1341 = vmul.f32 %v1297, %v1338
        %v1342 = vmul.f32 %v1298, %v1339
        %v1343 = vadd.f32 %v1318, %v1340
        %v1344 = vadd.f32 %v1319, %v1341
        %v1345 = vadd.f32 %v1320, %v1342
        %v1346 = vadd.f32 %v1343, %v1236
        %v1347 = vadd.f32 %v1344, %v1237
        %v1348 = vadd.f32 %v1345, %v1238
        %1349 = vst.msk [vmem:[%s265] sm:$0xff] %vm1087, %v1346
        %1350 = vst.msk [vmem:[%s265 + $0x8] sm:$0xff] %vm1087, %v1347
        %1351 = vst.msk [vmem:[%s265 + $0x10] sm:$0xf] %vm1094, %v1348
        %p1352 = scmp.lt.s32.totalorder %s18, 1
        %s1353 = scalar_select %p1352, %s18, 1
        %s1354 = smul.addr %s1353, 3
        %s1355 = smul.addr %s1354, 8
        %s1356 = scalar_lea.vmem %s5, %s1355
        // Predicated region
        $region53: #{_lambda_.1} parent=39 // pred_check
          %p1357 = pneg %p146
        $region54: #{_lambda_.1} parent=39 // pred_check_branch
          %1359 = sbr.rel (%p1357) target = $region56
        $region55: #{_lambda_.1} parent=39 // pred_region
          _
        $region56: #{_lambda_.1} parent=39 // pred_fallthru
          _
      $region40: #{_lambda_.1} parent=5 // pred_fallthru
        _
      %p1360 = scmp.le.s32.totalorder 2, %s13
      // Predicated region
      $region57: #{_lambda_.1} parent=5 // pred_check
        %p1361 = pneg %p1360
      $region58: #{_lambda_.1} parent=5 // pred_check_branch
        %1363 = sbr.rel (%p1361) target = $region60
      $region59: #{_lambda_.1} parent=5 // pred_region
        %s1364 = ssub.s32 %s13, 2
        // Predicated region
        $region61: #{_lambda_.1} parent=59 // pred_check
          %p1365 = pneg %p152
        $region62: #{_lambda_.1} parent=59 // pred_check_branch
          %1367 = sbr.rel (%p1365) target = $region64
        $region63: #{_lambda_.1} parent=59 // pred_region
          %p1368 = scmp.lt.s32.totalorder %s19, 1
          %s1369 = scalar_select %p1368, %s19, 1
          %s1370 = smul.addr %s1369, 3
          %s1371 = smul.addr %s1370, 8
          %s1372 = scalar_lea.vmem %s5, %s1371
        $region64: #{_lambda_.1} parent=59 // pred_fallthru
          _
      $region60: #{_lambda_.1} parent=5 // pred_fallthru
        _
    $region6: #{_lambda_.1} parent=1 // loop_footer
      %s17 = sadd.s32 1, %s13
    $region7: #{_lambda_.1} parent=1 // loop_footer_branch
      %12 = sbr.rel target = $region3
    $region8: #{_lambda_.1} parent=1 // loop_exit
      _
    %1373 = vsyncpa [#allocation4], 1
    %s1374 = scalar_lea.sflag [#allocation4], 1
    %1375 = vsyncpa %s1374, 1
    %1376 = vsyncpa [#allocation6], 1

</llo_original>
